<compile_context>
chip_gen: v7x
topology: tpu7x:2x2x1
jax: 0.10.0
libtpu: 0.0.40
codegen_flags: <defaults>
</compile_context>

<pallas_src>
import jax
import jax.numpy as jnp
from jax.experimental import pallas as pl
from jax.experimental.pallas import tpu as pltpu

RRELU_SLOPE = (1.0 / 8.0 + 1.0 / 3.0) / 2.0  # 11/48, eval-mode RReLU
# TODO(synk): nn.RReLU train-mode random negative slope is not reproduced
# (eval-mode deterministic slope only).

# Layer widths of the MLP.
DIMS = [18, 64, 128, 64, 32, 8, 3]


def _rrelu_f32(h):
    return jnp.where(h >= 0, h, h * RRELU_SLOPE)


def _round_up(n, m):
    return ((n + m - 1) // m) * m


def _make_kernel(n_layers, tile_b, slab):
    """Fused forward pass on one (features, TILE_B) batch tile."""

    def kernel(x_ref, *refs):
        *wb_refs, o_ref = refs
        # Weights / biases are VMEM-resident; read them once per grid step
        # (hoisted out of the slab loop).
        ws = [wb_refs[2 * li][...] for li in range(n_layers)]      # (out, in) bf16
        bs = [wb_refs[2 * li + 1][...] for li in range(n_layers)]  # (out, 1)  f32

        # Compile-time-unrolled slab loop over 128-aligned lane chunks: keeps
        # the live activation chain at (<=128, slab) f32 instead of the full
        # tile width (spill-traffic reduction; same effect as
        # lax.fori_loop(..., unroll=True), but with static slices).
        for off in range(0, tile_b, slab):
            h = x_ref[:, off:off + slab]                 # (18, slab) bf16
            z = None
            for li in range(n_layers):
                # MXU matmul, f32 accumulation; N (= slab) is lane-dense.
                z = jnp.dot(ws[li], h,
                            preferred_element_type=jnp.float32) + bs[li]
                if li < n_layers - 1:
                    # Eval-mode RReLU (slope 11/48) in bf16 so v6e/v7x VPUs
                    # process packed lanes (numerics mirrored in the reference).
                    zb = z.astype(jnp.bfloat16)
                    h = jnp.where(zb >= 0, zb, zb * RRELU_SLOPE)

            logits = z                                   # (3, slab) f32
            # Softmax over the 3 logit rows (sublane-axis reduce -> XLU).
            m = jnp.max(logits, axis=0, keepdims=True)
            e = jnp.exp(logits - m)
            s = jnp.sum(e, axis=0, keepdims=True)
            inv = pl.reciprocal(s, approx=False)         # exact: rows sum to 1
            o_ref[:, off:off + slab] = (e * inv).astype(o_ref.dtype)

    return kernel


def neuronet_forward(x, params, *, tile_b=4096, slab=1024):
    """x: (B, 18) float32. params: list of (W, b) with W:(in,out), b:(1,out).

    Returns (B, 3) float32 softmax probabilities (PyTorch eval-mode semantics).
    """
    B = x.shape[0]
    b128 = _round_up(B, 128)

    # ---- tile / slab selection ---------------------------------------------
    slab = _round_up(max(128, min(slab, b128)), 128)
    tb = _round_up(min(max(tile_b, 128), b128), 128)
    # If one tile would cover a large batch, split it in two so the "parallel"
    # grid axis can shard across both TensorCores on v7x.
    if tb >= b128 and b128 >= 2 * slab:
        tb = _round_up((b128 + 1) // 2, 128)
    if tb > slab:
        tb = _round_up(tb, slab)          # inner slab loop must tile the block
    else:
        slab = tb
    b_pad = _round_up(B, tb)
    n_tiles = b_pad // tb

    # ---- operands ------------------------------------------------------------
    # Feature-major bf16 input, batch padded to b_pad. jnp.pad on a fused
    # transpose/cast (single pass) instead of zeros + at[].set.
    # TODO(synk): for peak throughput, produce feature-major bf16 activations
    # upstream (and consume feature-major output) to drop this round trip.
    x_t = jnp.pad(x.T.astype(jnp.bfloat16), ((0, 0), (0, b_pad - B)))

    flat_args = [x_t]
    in_specs = [pl.BlockSpec((DIMS[0], tb), lambda i: (0, i))]
    resident_bytes = 0
    for w, b in params:
        wt = w.T.astype(jnp.bfloat16)                # (out, in) bf16, resident
        bt = b.reshape(-1, 1).astype(jnp.float32)    # (out, 1)  f32, resident
        flat_args += [wt, bt]
        # Constant index_map -> DMA'd once, VMEM-resident across the grid.
        # (pl.Buffered(1) would drop their second buffer; skipped — only
        #  ~100 KiB and the VMEM budget has ample headroom.)
        in_specs += [pl.BlockSpec(wt.shape, lambda i: (0, 0)),
                     pl.BlockSpec(bt.shape, lambda i: (0, 0))]
        fo, fi = wt.shape
        resident_bytes += _round_up(fo, 16) * _round_up(fi, 128) * 2   # bf16 W^T
        resident_bytes += _round_up(fo, 8) * 128 * 4                   # f32 bias

    out_spec = pl.BlockSpec((DIMS[-1], tb), lambda i: (0, i))

    # ---- VMEM budget (fits v5e 16 MiB scoped default .. v7x 64 MiB/TC) ------
    stream_bytes = 32 * tb * 2 + 8 * tb * 4           # sublane-padded x / out tile
    slab_live_bytes = max(DIMS) * slab * (4 + 2)      # widest f32 z + bf16 h / slab
    vmem_need = 2 * (stream_bytes + resident_bytes) + 4 * slab_live_bytes
    vmem_limit = int(min(max(3 * vmem_need, 16 * 2**20), 32 * 2**20))

    flops = 2 * b_pad * sum(DIMS[i] * DIMS[i + 1] for i in range(len(DIMS) - 1))
    cost = pl.CostEstimate(
        flops=flops,
        transcendentals=(DIMS[-1] + 1) * b_pad,       # 3 exps + 1 recip / column
        bytes_accessed=b_pad * DIMS[0] * 2 + b_pad * DIMS[-1] * 4 + resident_bytes,
    )

    out_t = pl.pallas_call(
        _make_kernel(len(params), tb, slab),
        out_shape=jax.ShapeDtypeStruct((DIMS[-1], b_pad), jnp.float32),
        grid=(n_tiles,),
        in_specs=in_specs,
        out_specs=out_spec,
        compiler_params=pltpu.CompilerParams(
            dimension_semantics=("parallel",),        # megacore sharding on v7x
            vmem_limit_bytes=vmem_limit),
        cost_estimate=cost,
    )(*flat_args)

    # Back to batch-major, drop padding.
    return out_t[:, :B].T


def init_params(key):
    """Deterministic init mimicking nn.Linear's U(-1/sqrt(fan_in), 1/sqrt(fan_in))."""
    params = []
    for i in range(len(DIMS) - 1):
        fan_in, fan_out = DIMS[i], DIMS[i + 1]
        key, kw, kb = jax.random.split(key, 3)
        bound = 1.0 / jnp.sqrt(jnp.float32(fan_in))
        w = jax.random.uniform(kw, (fan_in, fan_out), jnp.float32, -bound, bound)
        b = jax.random.uniform(kb, (1, fan_out), jnp.float32, -bound, bound)
        params.append((w, b))
    return params


def reference_forward(x, params):
    """Pure-f32 reference (PyTorch eval-mode semantics)."""
    h = x
    for i, (w, b) in enumerate(params):
        h = h @ w + b
        if i < len(params) - 1:
            h = _rrelu_f32(h)
    return jax.nn.softmax(h, axis=-1)


def mirror_reference(x, params):
    """Pure-JAX reference mirroring the kernel's bf16 storage / f32 accumulation."""
    h = x.astype(jnp.bfloat16)
    z = None
    for i, (w, b) in enumerate(params):
        z = jnp.dot(h, w.astype(jnp.bfloat16),
                    preferred_element_type=jnp.float32) + b
        if i < len(params) - 1:
            zb = z.astype(jnp.bfloat16)
            h = jnp.where(zb >= 0, zb, zb * RRELU_SLOPE)
    return jax.nn.softmax(z, axis=-1)


if __name__ == "__main__":
    key = jax.random.PRNGKey(0)
    key, kx = jax.random.split(key)

    B = 300  # small; deliberately not a multiple of the 128-lane tile
    x = jax.random.normal(kx, (B, DIMS[0]), jnp.float32)
    params = init_params(key)

    # Default config (single tile / single slab at this small B) and a small
    # explicit config (tile_b=256, slab=128 -> 2 grid steps x 2 inner slabs)
    # to exercise both the pipelined grid and the in-kernel slab loop.
    out = jax.block_until_ready(neuronet_forward(x, params))
    out_multi = jax.block_until_ready(
        neuronet_forward(x, params, tile_b=256, slab=128))

    ref_f32 = reference_forward(x, params)
    ref_bf16 = mirror_reference(x, params)

    for o in (out, out_multi):
        assert o.shape == (B, DIMS[-1])
        assert bool(jnp.all(jnp.isfinite(o)))
        # Check vs a reference that mirrors the kernel's bf16/f32 numerics.
        assert jnp.allclose(o, ref_bf16, atol=1e-2, rtol=0.0), \
            "mismatch vs bf16-mirror reference"
        # Loose check vs the pure-f32 (PyTorch eval-mode) reference.
        assert jnp.allclose(o, ref_f32, atol=5e-2, rtol=0.0), \
            "mismatch vs f32 reference"
        # Exact reciprocal -> softmax rows sum to 1 within f32 rounding.
        assert jnp.allclose(jnp.sum(o, axis=-1), jnp.ones((B,)), atol=1e-4)

    print("KERNEL_OK")
</pallas_src>

<mosaic_0001>
module attributes {stable_mosaic.version = 11 : i64} {
  func.func @kernel(%arg0: i32, %arg1: memref<18x384xbf16, #tpu.memory_space<vmem>>, %arg2: memref<64x18xbf16, #tpu.memory_space<vmem>>, %arg3: memref<64x1xf32, #tpu.memory_space<vmem>>, %arg4: memref<128x64xbf16, #tpu.memory_space<vmem>>, %arg5: memref<128x1xf32, #tpu.memory_space<vmem>>, %arg6: memref<64x128xbf16, #tpu.memory_space<vmem>>, %arg7: memref<64x1xf32, #tpu.memory_space<vmem>>, %arg8: memref<32x64xbf16, #tpu.memory_space<vmem>>, %arg9: memref<32x1xf32, #tpu.memory_space<vmem>>, %arg10: memref<8x32xbf16, #tpu.memory_space<vmem>>, %arg11: memref<8x1xf32, #tpu.memory_space<vmem>>, %arg12: memref<3x8xbf16, #tpu.memory_space<vmem>>, %arg13: memref<3x1xf32, #tpu.memory_space<vmem>>, %arg14: memref<3x384xf32, #tpu.memory_space<vmem>>) attributes {dimension_semantics = [#tpu.dimension_semantics<parallel>], iteration_bounds = array<i64: 1>, scalar_prefetch = 0 : i64, scratch_operands = 0 : i64, tpu.core_type = #tpu.core_type<tc>, window_params = [{transform_indices = @transform_0, window_bounds = array<i64: 18, 384>}, {pipeline_mode = #tpu.pipeline_mode<synchronous>, transform_indices = @transform_1, window_bounds = array<i64: 64, 18>}, {pipeline_mode = #tpu.pipeline_mode<synchronous>, transform_indices = @transform_2, window_bounds = array<i64: 64, 1>}, {pipeline_mode = #tpu.pipeline_mode<synchronous>, transform_indices = @transform_3, window_bounds = array<i64: 128, 64>}, {pipeline_mode = #tpu.pipeline_mode<synchronous>, transform_indices = @transform_4, window_bounds = array<i64: 128, 1>}, {pipeline_mode = #tpu.pipeline_mode<synchronous>, transform_indices = @transform_5, window_bounds = array<i64: 64, 128>}, {pipeline_mode = #tpu.pipeline_mode<synchronous>, transform_indices = @transform_6, window_bounds = array<i64: 64, 1>}, {pipeline_mode = #tpu.pipeline_mode<synchronous>, transform_indices = @transform_7, window_bounds = array<i64: 32, 64>}, {pipeline_mode = #tpu.pipeline_mode<synchronous>, transform_indices = @transform_8, window_bounds = array<i64: 32, 1>}, {pipeline_mode = #tpu.pipeline_mode<synchronous>, transform_indices = @transform_9, window_bounds = array<i64: 8, 32>}, {pipeline_mode = #tpu.pipeline_mode<synchronous>, transform_indices = @transform_10, window_bounds = array<i64: 8, 1>}, {pipeline_mode = #tpu.pipeline_mode<synchronous>, transform_indices = @transform_11, window_bounds = array<i64: 3, 8>}, {pipeline_mode = #tpu.pipeline_mode<synchronous>, transform_indices = @transform_12, window_bounds = array<i64: 3, 1>}, {transform_indices = @transform_13, window_bounds = array<i64: 3, 384>}]} {
    %c0 = arith.constant 0 : index
    %c0_0 = arith.constant 0 : index
    %0 = vector.load %arg2[%c0, %c0_0] : memref<64x18xbf16, #tpu.memory_space<vmem>>, vector<64x18xbf16>
    %c0_1 = arith.constant 0 : index
    %c0_2 = arith.constant 0 : index
    %1 = vector.load %arg4[%c0_1, %c0_2] : memref<128x64xbf16, #tpu.memory_space<vmem>>, vector<128x64xbf16>
    %c0_3 = arith.constant 0 : index
    %c0_4 = arith.constant 0 : index
    %2 = vector.load %arg6[%c0_3, %c0_4] : memref<64x128xbf16, #tpu.memory_space<vmem>>, vector<64x128xbf16>
    %c0_5 = arith.constant 0 : index
    %c0_6 = arith.constant 0 : index
    %3 = vector.load %arg8[%c0_5, %c0_6] : memref<32x64xbf16, #tpu.memory_space<vmem>>, vector<32x64xbf16>
    %c0_7 = arith.constant 0 : index
    %c0_8 = arith.constant 0 : index
    %4 = vector.load %arg10[%c0_7, %c0_8] : memref<8x32xbf16, #tpu.memory_space<vmem>>, vector<8x32xbf16>
    %c0_9 = arith.constant 0 : index
    %c0_10 = arith.constant 0 : index
    %5 = vector.load %arg12[%c0_9, %c0_10] : memref<3x8xbf16, #tpu.memory_space<vmem>>, vector<3x8xbf16>
    %c0_11 = arith.constant 0 : index
    %c0_12 = arith.constant 0 : index
    %6 = vector.load %arg3[%c0_11, %c0_12] : memref<64x1xf32, #tpu.memory_space<vmem>>, vector<64x1xf32>
    %c0_13 = arith.constant 0 : index
    %c0_14 = arith.constant 0 : index
    %7 = vector.load %arg5[%c0_13, %c0_14] : memref<128x1xf32, #tpu.memory_space<vmem>>, vector<128x1xf32>
    %c0_15 = arith.constant 0 : index
    %c0_16 = arith.constant 0 : index
    %8 = vector.load %arg7[%c0_15, %c0_16] : memref<64x1xf32, #tpu.memory_space<vmem>>, vector<64x1xf32>
    %c0_17 = arith.constant 0 : index
    %c0_18 = arith.constant 0 : index
    %9 = vector.load %arg9[%c0_17, %c0_18] : memref<32x1xf32, #tpu.memory_space<vmem>>, vector<32x1xf32>
    %c0_19 = arith.constant 0 : index
    %c0_20 = arith.constant 0 : index
    %10 = vector.load %arg11[%c0_19, %c0_20] : memref<8x1xf32, #tpu.memory_space<vmem>>, vector<8x1xf32>
    %c0_21 = arith.constant 0 : index
    %c0_22 = arith.constant 0 : index
    %11 = vector.load %arg13[%c0_21, %c0_22] : memref<3x1xf32, #tpu.memory_space<vmem>>, vector<3x1xf32>
    %c0_23 = arith.constant 0 : index
    %c0_24 = arith.constant 0 : index
    %12 = vector.load %arg1[%c0_23, %c0_24] : memref<18x384xbf16, #tpu.memory_space<vmem>>, vector<18x384xbf16>
    %cst = arith.constant dense<0.000000e+00> : vector<64x384xf32>
    %13 = tpu.matmul %0, %12, %cst {dimension_numbers = #tpu.dot_dimension_numbers<[1], [0], [0], [1], [0, 0, 1, 1], [], []>} : vector<64x18xbf16>, vector<18x384xbf16>, vector<64x384xf32> -> vector<64x384xf32>
    %14 = vector.broadcast %6 : vector<64x1xf32> to vector<64x384xf32>
    %15 = arith.addf %13, %14 : vector<64x384xf32>
    %16 = arith.truncf %15 : vector<64x384xf32> to vector<64x384xbf16>
    %cst_25 = arith.constant 0.000000e+00 : bf16
    %17 = vector.broadcast %cst_25 : bf16 to vector<64x384xbf16>
    %18 = arith.cmpf oge, %16, %17 : vector<64x384xbf16>
    %cst_26 = arith.constant 2.294920e-01 : bf16
    %19 = vector.broadcast %cst_26 : bf16 to vector<64x384xbf16>
    %20 = arith.mulf %16, %19 : vector<64x384xbf16>
    %21 = arith.select %18, %16, %20 : vector<64x384xi1>, vector<64x384xbf16>
    %cst_27 = arith.constant dense<0.000000e+00> : vector<128x384xf32>
    %22 = tpu.matmul %1, %21, %cst_27 {dimension_numbers = #tpu.dot_dimension_numbers<[1], [0], [0], [1], [0, 0, 1, 1], [], []>} : vector<128x64xbf16>, vector<64x384xbf16>, vector<128x384xf32> -> vector<128x384xf32>
    %23 = vector.broadcast %7 : vector<128x1xf32> to vector<128x384xf32>
    %24 = arith.addf %22, %23 : vector<128x384xf32>
    %25 = arith.truncf %24 : vector<128x384xf32> to vector<128x384xbf16>
    %cst_28 = arith.constant 0.000000e+00 : bf16
    %26 = vector.broadcast %cst_28 : bf16 to vector<128x384xbf16>
    %27 = arith.cmpf oge, %25, %26 : vector<128x384xbf16>
    %cst_29 = arith.constant 2.294920e-01 : bf16
    %28 = vector.broadcast %cst_29 : bf16 to vector<128x384xbf16>
    %29 = arith.mulf %25, %28 : vector<128x384xbf16>
    %30 = arith.select %27, %25, %29 : vector<128x384xi1>, vector<128x384xbf16>
    %cst_30 = arith.constant dense<0.000000e+00> : vector<64x384xf32>
    %31 = tpu.matmul %2, %30, %cst_30 {dimension_numbers = #tpu.dot_dimension_numbers<[1], [0], [0], [1], [0, 0, 1, 1], [], []>} : vector<64x128xbf16>, vector<128x384xbf16>, vector<64x384xf32> -> vector<64x384xf32>
    %32 = vector.broadcast %8 : vector<64x1xf32> to vector<64x384xf32>
    %33 = arith.addf %31, %32 : vector<64x384xf32>
    %34 = arith.truncf %33 : vector<64x384xf32> to vector<64x384xbf16>
    %cst_31 = arith.constant 0.000000e+00 : bf16
    %35 = vector.broadcast %cst_31 : bf16 to vector<64x384xbf16>
    %36 = arith.cmpf oge, %34, %35 : vector<64x384xbf16>
    %cst_32 = arith.constant 2.294920e-01 : bf16
    %37 = vector.broadcast %cst_32 : bf16 to vector<64x384xbf16>
    %38 = arith.mulf %34, %37 : vector<64x384xbf16>
    %39 = arith.select %36, %34, %38 : vector<64x384xi1>, vector<64x384xbf16>
    %cst_33 = arith.constant dense<0.000000e+00> : vector<32x384xf32>
    %40 = tpu.matmul %3, %39, %cst_33 {dimension_numbers = #tpu.dot_dimension_numbers<[1], [0], [0], [1], [0, 0, 1, 1], [], []>} : vector<32x64xbf16>, vector<64x384xbf16>, vector<32x384xf32> -> vector<32x384xf32>
    %41 = vector.broadcast %9 : vector<32x1xf32> to vector<32x384xf32>
    %42 = arith.addf %40, %41 : vector<32x384xf32>
    %43 = arith.truncf %42 : vector<32x384xf32> to vector<32x384xbf16>
    %cst_34 = arith.constant 0.000000e+00 : bf16
    %44 = vector.broadcast %cst_34 : bf16 to vector<32x384xbf16>
    %45 = arith.cmpf oge, %43, %44 : vector<32x384xbf16>
    %cst_35 = arith.constant 2.294920e-01 : bf16
    %46 = vector.broadcast %cst_35 : bf16 to vector<32x384xbf16>
    %47 = arith.mulf %43, %46 : vector<32x384xbf16>
    %48 = arith.select %45, %43, %47 : vector<32x384xi1>, vector<32x384xbf16>
    %cst_36 = arith.constant dense<0.000000e+00> : vector<8x384xf32>
    %49 = tpu.matmul %4, %48, %cst_36 {dimension_numbers = #tpu.dot_dimension_numbers<[1], [0], [0], [1], [0, 0, 1, 1], [], []>} : vector<8x32xbf16>, vector<32x384xbf16>, vector<8x384xf32> -> vector<8x384xf32>
    %50 = vector.broadcast %10 : vector<8x1xf32> to vector<8x384xf32>
    %51 = arith.addf %49, %50 : vector<8x384xf32>
    %52 = arith.truncf %51 : vector<8x384xf32> to vector<8x384xbf16>
    %cst_37 = arith.constant 0.000000e+00 : bf16
    %53 = vector.broadcast %cst_37 : bf16 to vector<8x384xbf16>
    %54 = arith.cmpf oge, %52, %53 : vector<8x384xbf16>
    %cst_38 = arith.constant 2.294920e-01 : bf16
    %55 = vector.broadcast %cst_38 : bf16 to vector<8x384xbf16>
    %56 = arith.mulf %52, %55 : vector<8x384xbf16>
    %57 = arith.select %54, %52, %56 : vector<8x384xi1>, vector<8x384xbf16>
    %cst_39 = arith.constant dense<0.000000e+00> : vector<3x384xf32>
    %58 = tpu.matmul %5, %57, %cst_39 {dimension_numbers = #tpu.dot_dimension_numbers<[1], [0], [0], [1], [0, 0, 1, 1], [], []>} : vector<3x8xbf16>, vector<8x384xbf16>, vector<3x384xf32> -> vector<3x384xf32>
    %59 = vector.broadcast %11 : vector<3x1xf32> to vector<3x384xf32>
    %60 = arith.addf %58, %59 : vector<3x384xf32>
    %cst_40 = arith.constant dense<0xFF800000> : vector<384xf32>
    %61 = vector.multi_reduction <maximumf>, %60, %cst_40 [0] : vector<3x384xf32> to vector<384xf32>
    %62 = vector.shape_cast %61 : vector<384xf32> to vector<1x384xf32>
    %63 = vector.broadcast %62 : vector<1x384xf32> to vector<3x384xf32>
    %64 = arith.subf %60, %63 : vector<3x384xf32>
    %65 = math.exp %64 : vector<3x384xf32>
    %cst_41 = arith.constant dense<0.000000e+00> : vector<384xf32>
    %66 = vector.multi_reduction <add>, %65, %cst_41 [0] : vector<3x384xf32> to vector<384xf32>
    %67 = vector.shape_cast %66 : vector<384xf32> to vector<1x384xf32>
    %68 = tpu.reciprocal %67 : vector<1x384xf32> -> vector<1x384xf32>
    %69 = vector.broadcast %68 : vector<1x384xf32> to vector<3x384xf32>
    %70 = arith.mulf %65, %69 : vector<3x384xf32>
    %c0_42 = arith.constant 0 : index
    %c0_43 = arith.constant 0 : index
    %71 = vector.load %arg14[%c0_42, %c0_43] : memref<3x384xf32, #tpu.memory_space<vmem>>, vector<3x384xf32>
    tpu.vector_store %arg14[%c0_42, %c0_43], %70 {strides = array<i32>} : memref<3x384xf32, #tpu.memory_space<vmem>>, vector<3x384xf32>,
    return
  }
  func.func @transform_0(%arg0: i32) -> (i32, i32) {
    %c0_i32 = arith.constant 0 : i32
    %c0_i32_0 = arith.constant 0 : i32
    return %c0_i32, %arg0 : i32, i32
  }
  func.func @transform_1(%arg0: i32) -> (i32, i32) {
    %c0_i32 = arith.constant 0 : i32
    %c0_i32_0 = arith.constant 0 : i32
    %c0_i32_1 = arith.constant 0 : i32
    return %c0_i32, %c0_i32_0 : i32, i32
  }
  func.func @transform_2(%arg0: i32) -> (i32, i32) {
    %c0_i32 = arith.constant 0 : i32
    %c0_i32_0 = arith.constant 0 : i32
    %c0_i32_1 = arith.constant 0 : i32
    return %c0_i32, %c0_i32_0 : i32, i32
  }
  func.func @transform_3(%arg0: i32) -> (i32, i32) {
    %c0_i32 = arith.constant 0 : i32
    %c0_i32_0 = arith.constant 0 : i32
    %c0_i32_1 = arith.constant 0 : i32
    return %c0_i32, %c0_i32_0 : i32, i32
  }
  func.func @transform_4(%arg0: i32) -> (i32, i32) {
    %c0_i32 = arith.constant 0 : i32
    %c0_i32_0 = arith.constant 0 : i32
    %c0_i32_1 = arith.constant 0 : i32
    return %c0_i32, %c0_i32_0 : i32, i32
  }
  func.func @transform_5(%arg0: i32) -> (i32, i32) {
    %c0_i32 = arith.constant 0 : i32
    %c0_i32_0 = arith.constant 0 : i32
    %c0_i32_1 = arith.constant 0 : i32
    return %c0_i32, %c0_i32_0 : i32, i32
  }
  func.func @transform_6(%arg0: i32) -> (i32, i32) {
    %c0_i32 = arith.constant 0 : i32
    %c0_i32_0 = arith.constant 0 : i32
    %c0_i32_1 = arith.constant 0 : i32
    return %c0_i32, %c0_i32_0 : i32, i32
  }
  func.func @transform_7(%arg0: i32) -> (i32, i32) {
    %c0_i32 = arith.constant 0 : i32
    %c0_i32_0 = arith.constant 0 : i32
    %c0_i32_1 = arith.constant 0 : i32
    return %c0_i32, %c0_i32_0 : i32, i32
  }
  func.func @transform_8(%arg0: i32) -> (i32, i32) {
    %c0_i32 = arith.constant 0 : i32
    %c0_i32_0 = arith.constant 0 : i32
    %c0_i32_1 = arith.constant 0 : i32
    return %c0_i32, %c0_i32_0 : i32, i32
  }
  func.func @transform_9(%arg0: i32) -> (i32, i32) {
    %c0_i32 = arith.constant 0 : i32
    %c0_i32_0 = arith.constant 0 : i32
    %c0_i32_1 = arith.constant 0 : i32
    return %c0_i32, %c0_i32_0 : i32, i32
  }
  func.func @transform_10(%arg0: i32) -> (i32, i32) {
    %c0_i32 = arith.constant 0 : i32
    %c0_i32_0 = arith.constant 0 : i32
    %c0_i32_1 = arith.constant 0 : i32
    return %c0_i32, %c0_i32_0 : i32, i32
  }
  func.func @transform_11(%arg0: i32) -> (i32, i32) {
    %c0_i32 = arith.constant 0 : i32
    %c0_i32_0 = arith.constant 0 : i32
    %c0_i32_1 = arith.constant 0 : i32
    return %c0_i32, %c0_i32_0 : i32, i32
  }
  func.func @transform_12(%arg0: i32) -> (i32, i32) {
    %c0_i32 = arith.constant 0 : i32
    %c0_i32_0 = arith.constant 0 : i32
    %c0_i32_1 = arith.constant 0 : i32
    return %c0_i32, %c0_i32_0 : i32, i32
  }
  func.func @transform_13(%arg0: i32) -> (i32, i32) {
    %c0_i32 = arith.constant 0 : i32
    %c0_i32_0 = arith.constant 0 : i32
    return %c0_i32, %arg0 : i32, i32
  }
}

</mosaic_0001>

<llo_original>
// kernel: tpu_custom_call.1
$region0: #{tpu_custom_call.1}
  #allocation0 [shape = 'u32[]', space=smem, size = 0x4, offset = 0x4, fixed_abs, tag = 'smem constant byte address 0x4 - core index']
  #allocation1 [shape = 'u32[144,128]{1,0:T(1,128)}', space=vmem, size = 0x12000, scoped, tag = 'internal scratch']
  %s0 = inlined_call_operand.vmem [shape: bf16[18,384], index: 0, kind: input, shape index: {}]
  %s1 = inlined_call_operand.vmem [shape: bf16[64,18], index: 1, kind: input, shape index: {}]
  %s2 = inlined_call_operand.vmem [shape: f32[64,1], index: 2, kind: input, shape index: {}]
  %s3 = inlined_call_operand.vmem [shape: bf16[128,64], index: 3, kind: input, shape index: {}]
  %s4 = inlined_call_operand.vmem [shape: f32[128,1], index: 4, kind: input, shape index: {}]
  %s5 = inlined_call_operand.vmem [shape: bf16[64,128], index: 5, kind: input, shape index: {}]
  %s6 = inlined_call_operand.vmem [shape: f32[64,1], index: 6, kind: input, shape index: {}]
  %s7 = inlined_call_operand.vmem [shape: bf16[32,64], index: 7, kind: input, shape index: {}]
  %s8 = inlined_call_operand.vmem [shape: f32[32,1], index: 8, kind: input, shape index: {}]
  %s9 = inlined_call_operand.vmem [shape: bf16[8,32], index: 9, kind: input, shape index: {}]
  %s10 = inlined_call_operand.vmem [shape: f32[8,1], index: 10, kind: input, shape index: {}]
  %s11 = inlined_call_operand.vmem [shape: bf16[3,8], index: 11, kind: input, shape index: {}]
  %s12 = inlined_call_operand.vmem [shape: f32[3,1], index: 12, kind: input, shape index: {}]
  %s13 = inlined_call_operand.hbm [shape: f32[3,384], index: 13, kind: output, shape index: {}]
  %s14 = sld [smem:[#allocation0]]
  $region62: #{tpu_custom_call.1} parent=0
    _
  %s16 = ssub.s32 1, %s14
  %s17 = scalar_select 0, %s16, %s14
  $region1: #{tpu_custom_call.1} parent=0
    #allocation2 [shape = 'u8[6144]{0}', space=vmem, size = 0x1800, scoped, tag = 'output window, operand 0, single buffered']
    #allocation3 [shape = 's32[1]{0}', space=sflag, size = 0x4, scoped, tag = 'scoped memory for tpu_custom_call.1']
    %18 = vsyncpa [#allocation3], 0
    // Predicated region
    $region2: #{tpu_custom_call.1} parent=1 // pred_check
      _
    $region3: #{tpu_custom_call.1} parent=1 // pred_check_branch
      %20 = sbr.rel (0) target = $region5
    $region4: #{tpu_custom_call.1} parent=1 // pred_region
      _
    $region5: #{tpu_custom_call.1} parent=1 // pred_fallthru
      _
    // Predicated region
    $region6: #{tpu_custom_call.1} parent=1 // pred_check
      _
    $region7: #{tpu_custom_call.1} parent=1 // pred_check_branch
      %22 = sbr.rel (0) target = $region9
    $region8: #{tpu_custom_call.1} parent=1 // pred_region
      _
    $region9: #{tpu_custom_call.1} parent=1 // pred_fallthru
      _
    // Predicated region
    $region10: #{tpu_custom_call.1} parent=1 // pred_check
      _
    $region11: #{tpu_custom_call.1} parent=1 // pred_check_branch
      %24 = sbr.rel (0) target = $region13
    $region12: #{tpu_custom_call.1} parent=1 // pred_region
      _
    $region13: #{tpu_custom_call.1} parent=1 // pred_fallthru
      _
    // Predicated region
    $region14: #{tpu_custom_call.1} parent=1 // pred_check
      _
    $region15: #{tpu_custom_call.1} parent=1 // pred_check_branch
      %26 = sbr.rel (0) target = $region17
    $region16: #{tpu_custom_call.1} parent=1 // pred_region
      _
    $region17: #{tpu_custom_call.1} parent=1 // pred_fallthru
      _
    // Predicated region
    $region18: #{tpu_custom_call.1} parent=1 // pred_check
      _
    $region19: #{tpu_custom_call.1} parent=1 // pred_check_branch
      %28 = sbr.rel (0) target = $region21
    $region20: #{tpu_custom_call.1} parent=1 // pred_region
      _
    $region21: #{tpu_custom_call.1} parent=1 // pred_fallthru
      _
    // Predicated region
    $region22: #{tpu_custom_call.1} parent=1 // pred_check
      _
    $region23: #{tpu_custom_call.1} parent=1 // pred_check_branch
      %30 = sbr.rel (0) target = $region25
    $region24: #{tpu_custom_call.1} parent=1 // pred_region
      _
    $region25: #{tpu_custom_call.1} parent=1 // pred_fallthru
      _
    // Predicated region
    $region26: #{tpu_custom_call.1} parent=1 // pred_check
      _
    $region27: #{tpu_custom_call.1} parent=1 // pred_check_branch
      %32 = sbr.rel (0) target = $region29
    $region28: #{tpu_custom_call.1} parent=1 // pred_region
      _
    $region29: #{tpu_custom_call.1} parent=1 // pred_fallthru
      _
    // Predicated region
    $region30: #{tpu_custom_call.1} parent=1 // pred_check
      _
    $region31: #{tpu_custom_call.1} parent=1 // pred_check_branch
      %34 = sbr.rel (0) target = $region33
    $region32: #{tpu_custom_call.1} parent=1 // pred_region
      _
    $region33: #{tpu_custom_call.1} parent=1 // pred_fallthru
      _
    // Predicated region
    $region34: #{tpu_custom_call.1} parent=1 // pred_check
      _
    $region35: #{tpu_custom_call.1} parent=1 // pred_check_branch
      %36 = sbr.rel (0) target = $region37
    $region36: #{tpu_custom_call.1} parent=1 // pred_region
      _
    $region37: #{tpu_custom_call.1} parent=1 // pred_fallthru
      _
    // Predicated region
    $region38: #{tpu_custom_call.1} parent=1 // pred_check
      _
    $region39: #{tpu_custom_call.1} parent=1 // pred_check_branch
      %38 = sbr.rel (0) target = $region41
    $region40: #{tpu_custom_call.1} parent=1 // pred_region
      _
    $region41: #{tpu_custom_call.1} parent=1 // pred_fallthru
      _
    // Predicated region
    $region42: #{tpu_custom_call.1} parent=1 // pred_check
      _
    $region43: #{tpu_custom_call.1} parent=1 // pred_check_branch
      %40 = sbr.rel (0) target = $region45
    $region44: #{tpu_custom_call.1} parent=1 // pred_region
      _
    $region45: #{tpu_custom_call.1} parent=1 // pred_fallthru
      _
    // Predicated region
    $region46: #{tpu_custom_call.1} parent=1 // pred_check
      _
    $region47: #{tpu_custom_call.1} parent=1 // pred_check_branch
      %42 = sbr.rel (0) target = $region49
    $region48: #{tpu_custom_call.1} parent=1 // pred_region
      _
    $region49: #{tpu_custom_call.1} parent=1 // pred_fallthru
      _
    // Predicated region
    $region50: #{tpu_custom_call.1} parent=1 // pred_check
      _
    $region51: #{tpu_custom_call.1} parent=1 // pred_check_branch
      %44 = sbr.rel (0) target = $region53
    $region52: #{tpu_custom_call.1} parent=1 // pred_region
      _
    $region53: #{tpu_custom_call.1} parent=1 // pred_fallthru
      _
    %v47 = vld [vmem:[%s1] sm:$0xf]
    %v48 = vld [vmem:[%s1 + $0x4] sm:$0xf]
    %v49 = vld [vmem:[%s1 + $0x8] sm:$0xf]
    %v50 = vld [vmem:[%s1 + $0xc] sm:$0xf]
    %v51 = vld [vmem:[%s1 + $0x10] sm:$0xf]
    %v52 = vld [vmem:[%s1 + $0x14] sm:$0xf]
    %v53 = vld [vmem:[%s1 + $0x18] sm:$0xf]
    %v54 = vld [vmem:[%s1 + $0x1c] sm:$0xf]
    %v55 = vld [vmem:[%s3] sm:$0xf]
    %v56 = vld [vmem:[%s3 + $0x4] sm:$0xf]
    %v57 = vld [vmem:[%s3 + $0x8] sm:$0xf]
    %v58 = vld [vmem:[%s3 + $0xc] sm:$0xf]
    %v59 = vld [vmem:[%s3 + $0x10] sm:$0xf]
    %v60 = vld [vmem:[%s3 + $0x14] sm:$0xf]
    %v61 = vld [vmem:[%s3 + $0x18] sm:$0xf]
    %v62 = vld [vmem:[%s3 + $0x1c] sm:$0xf]
    %v63 = vld [vmem:[%s3 + $0x20] sm:$0xf]
    %v64 = vld [vmem:[%s3 + $0x24] sm:$0xf]
    %v65 = vld [vmem:[%s3 + $0x28] sm:$0xf]
    %v66 = vld [vmem:[%s3 + $0x2c] sm:$0xf]
    %v67 = vld [vmem:[%s3 + $0x30] sm:$0xf]
    %v68 = vld [vmem:[%s3 + $0x34] sm:$0xf]
    %v69 = vld [vmem:[%s3 + $0x38] sm:$0xf]
    %v70 = vld [vmem:[%s3 + $0x3c] sm:$0xf]
    %v71 = vld [vmem:[%s5] sm:$0xf]
    %v72 = vld [vmem:[%s5 + $0x4] sm:$0xf]
    %v73 = vld [vmem:[%s5 + $0x8] sm:$0xf]
    %v74 = vld [vmem:[%s5 + $0xc] sm:$0xf]
    %v75 = vld [vmem:[%s5 + $0x10] sm:$0xf]
    %v76 = vld [vmem:[%s5 + $0x14] sm:$0xf]
    %v77 = vld [vmem:[%s5 + $0x18] sm:$0xf]
    %v78 = vld [vmem:[%s5 + $0x1c] sm:$0xf]
    %v79 = vld [vmem:[%s7] sm:$0xf]
    %v80 = vld [vmem:[%s7 + $0x4] sm:$0xf]
    %v81 = vld [vmem:[%s7 + $0x8] sm:$0xf]
    %v82 = vld [vmem:[%s7 + $0xc] sm:$0xf]
    %v83 = vld [vmem:[%s9] sm:$0xf]
    %v84 = vld [vmem:[%s11] sm:$0x3]
    %v85 = vld [vmem:[%s2] sm:$0xff]
    %v86 = vld [vmem:[%s2 + $0x8] sm:$0xff]
    %v87 = vld [vmem:[%s2 + $0x10] sm:$0xff]
    %v88 = vld [vmem:[%s2 + $0x18] sm:$0xff]
    %v89 = vld [vmem:[%s2 + $0x20] sm:$0xff]
    %v90 = vld [vmem:[%s2 + $0x28] sm:$0xff]
    %v91 = vld [vmem:[%s2 + $0x30] sm:$0xff]
    %v92 = vld [vmem:[%s2 + $0x38] sm:$0xff]
    %v93 = vld [vmem:[%s4] sm:$0xff]
    %v94 = vld [vmem:[%s4 + $0x8] sm:$0xff]
    %v95 = vld [vmem:[%s4 + $0x10] sm:$0xff]
    %v96 = vld [vmem:[%s4 + $0x18] sm:$0xff]
    %v97 = vld [vmem:[%s4 + $0x20] sm:$0xff]
    %v98 = vld [vmem:[%s4 + $0x28] sm:$0xff]
    %v99 = vld [vmem:[%s4 + $0x30] sm:$0xff]
    %v100 = vld [vmem:[%s4 + $0x38] sm:$0xff]
    %v101 = vld [vmem:[%s4 + $0x40] sm:$0xff]
    %v102 = vld [vmem:[%s4 + $0x48] sm:$0xff]
    %v103 = vld [vmem:[%s4 + $0x50] sm:$0xff]
    %v104 = vld [vmem:[%s4 + $0x58] sm:$0xff]
    %v105 = vld [vmem:[%s4 + $0x60] sm:$0xff]
    %v106 = vld [vmem:[%s4 + $0x68] sm:$0xff]
    %v107 = vld [vmem:[%s4 + $0x70] sm:$0xff]
    %v108 = vld [vmem:[%s4 + $0x78] sm:$0xff]
    %v109 = vld [vmem:[%s6] sm:$0xff]
    %v110 = vld [vmem:[%s6 + $0x8] sm:$0xff]
    %v111 = vld [vmem:[%s6 + $0x10] sm:$0xff]
    %v112 = vld [vmem:[%s6 + $0x18] sm:$0xff]
    %v113 = vld [vmem:[%s6 + $0x20] sm:$0xff]
    %v114 = vld [vmem:[%s6 + $0x28] sm:$0xff]
    %v115 = vld [vmem:[%s6 + $0x30] sm:$0xff]
    %v116 = vld [vmem:[%s6 + $0x38] sm:$0xff]
    %v117 = vld [vmem:[%s8] sm:$0xff]
    %v118 = vld [vmem:[%s8 + $0x8] sm:$0xff]
    %v119 = vld [vmem:[%s8 + $0x10] sm:$0xff]
    %v120 = vld [vmem:[%s8 + $0x18] sm:$0xff]
    %v121 = vld [vmem:[%s10] sm:$0xff]
    %v122 = vld [vmem:[%s12] sm:$0x7]
    %v123 = vld [vmem:[%s0] sm:$0xff]
    %v124 = vld [vmem:[%s0 + $0x8] sm:$0xf]
    %v125 = vld [vmem:[%s0 + $0xc] sm:$0xff]
    %v126 = vld [vmem:[%s0 + $0x14] sm:$0xf]
    %v127 = vld [vmem:[%s0 + $0x18] sm:$0x11]
    %v128 = vld [vmem:[%s0 + $0x20] sm:$0x1]
    %130 = vset.pattern.permute.xlu0 0
    %131 = vperm.xlu0 %130, %v85
    %v132 = vpop.permute.xlu0 %131
    %135 = vset.pattern.permute.xlu0 0
    %136 = vperm.xlu0 %135, %v86
    %v137 = vpop.permute.xlu0 %136
    %140 = vset.pattern.permute.xlu0 0
    %141 = vperm.xlu0 %140, %v87
    %v142 = vpop.permute.xlu0 %141
    %145 = vset.pattern.permute.xlu0 0
    %146 = vperm.xlu0 %145, %v88
    %v147 = vpop.permute.xlu0 %146
    %150 = vset.pattern.permute.xlu0 0
    %151 = vperm.xlu0 %150, %v89
    %v152 = vpop.permute.xlu0 %151
    %155 = vset.pattern.permute.xlu0 0
    %156 = vperm.xlu0 %155, %v90
    %v157 = vpop.permute.xlu0 %156
    %160 = vset.pattern.permute.xlu0 0
    %161 = vperm.xlu0 %160, %v91
    %v162 = vpop.permute.xlu0 %161
    %165 = vset.pattern.permute.xlu0 0
    %166 = vperm.xlu0 %165, %v92
    %v167 = vpop.permute.xlu0 %166
    %v177 = vunpack.c.l.b16 %v47
    %v178 = vunpack.c.l.b16 %v48
    %v179 = vunpack.c.l.b16 %v49
    %v180 = vunpack.c.l.b16 %v50
    %v181 = vunpack.c.l.b16 %v51
    %v182 = vunpack.c.l.b16 %v52
    %v183 = vunpack.c.l.b16 %v53
    %v184 = vunpack.c.l.b16 %v54
    %v185 = vpack.c.b16 %v178, %v177
    %v186 = vpack.c.b16 %v180, %v179
    %v187 = vpack.c.b16 %v182, %v181
    %v188 = vpack.c.b16 %v184, %v183
    %v195 = vunpack.c.l.b16 %v123
    %v196 = vunpack.c.h.b16 %v123
    %v197 = vunpack.c.l.b16 %v124
    %v198 = vunpack.c.l.b16 %v125
    %v199 = vunpack.c.h.b16 %v125
    %v200 = vunpack.c.l.b16 %v126
    %v201 = vunpack.c.l.b16 %v127
    %v202 = vunpack.c.h.b16 %v127
    %v203 = vunpack.c.l.b16 %v128
    %v204 = vpack.c.b16 %v198, %v195
    %v205 = vpack.c.b16 %v199, %v196
    %v206 = vpack.c.b16 %v200, %v197
    %v207 = vpack.c.b16 %v201, %v201
    %v208 = vpack.c.b16 %v202, %v202
    %v209 = vpack.c.b16 %v203, %v203
    %vm213 = vcmask 146432
    %v215 = vsel %vm213, %v185, 0
    %v218 = vsel %vm213, %v186, 0
    %v221 = vsel %vm213, %v187, 0
    %v224 = vsel %vm213, %v188, 0
    %vm226 = vcmask 1040384
    %v228 = vsel %vm226, %v207, 0
    %v231 = vsel %vm226, %v208, 0
    %v234 = vsel %vm226, %v209, 0
    %236 = vmatprep.subr.bf16.mxu0 %v205
    %237 = vmatpush1.bf16.msra.mxu0 %v204
    %238 = vmatprep.subr.bf16.mxu0 %v231
    %239 = vmatpush1.bf16.msra.mxu0 %v228
    %240 = vmatprep.subr.bf16.mxu0 0
    %241 = vmatpush1.bf16.msra.mxu0 0
    %242 = vmatprep.subr.bf16.mxu0 0
    %243 = vmatpush1.bf16.msra.mxu0 0
    %244 = vmatprep.subr.bf16.mxu0 0
    %245 = vmatpush1.bf16.msra.mxu0 0
    %246 = vmatprep.subr.bf16.mxu0 0
    %247 = vmatpush1.bf16.msra.mxu0 0
    %248 = vmatprep.subr.bf16.mxu0 0
    %249 = vmatpush1.bf16.msra.mxu0 0
    %250 = vmatprep.subr.bf16.mxu0 0
    %251 = vmatpush1.bf16.msra.mxu0 0
    %252 = vmatprep.subr.bf16.mxu0 0
    %253 = vmatpush1.bf16.msra.mxu0 0
    %254 = vmatprep.subr.bf16.mxu0 0
    %255 = vmatpush1.bf16.msra.mxu0 0
    %256 = vmatprep.subr.bf16.mxu0 0
    %257 = vmatpush1.bf16.msra.mxu0 0
    %258 = vmatprep.subr.bf16.mxu0 0
    %259 = vmatpush1.bf16.msra.mxu0 0
    %260 = vmatprep.subr.bf16.mxu0 0
    %261 = vmatpush1.bf16.msra.mxu0 0
    %262 = vmatprep.subr.bf16.mxu0 0
    %263 = vmatpush1.bf16.msra.mxu0 0
    %264 = vmatprep.subr.bf16.mxu0 0
    %265 = vmatpush1.bf16.msra.mxu0 0
    %266 = vmatprep.subr.bf16.mxu0 0
    %267 = vmatpush1.bf16.msra.mxu0 0
    %268 = vmatprep.mubr.bf16.mxu0 0
    %269 = vmatmul.mubr.bf16.gmra.mrb[0].mxu0 %v215
    %v270 = vpop.f32.mrb[0].mxu0
    %v271 = vadd.f32 %v132, %v270
    %v272 = vpop.f32.mrb[0].mxu0
    %v273 = vadd.f32 %v132, %v272
    %v274 = vpop.f32.mrb[0].mxu0
    %v275 = vadd.f32 %v137, %v274
    %v276 = vpop.f32.mrb[0].mxu0
    %v277 = vadd.f32 %v137, %v276
    %278 = vmatprep.mubr.bf16.mxu0 0
    %279 = vmatmul.mubr.bf16.gmra.mrb[0].mxu0 %v218
    %v280 = vpop.f32.mrb[0].mxu0
    %v281 = vadd.f32 %v142, %v280
    %v282 = vpop.f32.mrb[0].mxu0
    %v283 = vadd.f32 %v142, %v282
    %v284 = vpop.f32.mrb[0].mxu0
    %v285 = vadd.f32 %v147, %v284
    %v286 = vpop.f32.mrb[0].mxu0
    %v287 = vadd.f32 %v147, %v286
    %288 = vmatprep.mubr.bf16.mxu0 0
    %289 = vmatmul.mubr.bf16.gmra.mrb[0].mxu0 %v221
    %v290 = vpop.f32.mrb[0].mxu0
    %v291 = vadd.f32 %v152, %v290
    %v292 = vpop.f32.mrb[0].mxu0
    %v293 = vadd.f32 %v152, %v292
    %v294 = vpop.f32.mrb[0].mxu0
    %v295 = vadd.f32 %v157, %v294
    %v296 = vpop.f32.mrb[0].mxu0
    %v297 = vadd.f32 %v157, %v296
    %298 = vmatprep.mubr.bf16.mxu0 0
    %299 = vmatmul.mubr.bf16.gmra.mrb[0].mxu0 %v224
    %v300 = vpop.f32.mrb[0].mxu0
    %v301 = vadd.f32 %v162, %v300
    %v302 = vpop.f32.mrb[0].mxu0
    %v303 = vadd.f32 %v162, %v302
    %v304 = vpop.f32.mrb[0].mxu0
    %v305 = vadd.f32 %v167, %v304
    %v306 = vpop.f32.mrb[0].mxu0
    %v307 = vadd.f32 %v167, %v306
    %308 = vdwg.mxu0
    %309 = vmatprep.subr.bf16.mxu0 0
    %310 = vmatpush1.bf16.msra.mxu0 %v206
    %311 = vmatprep.subr.bf16.mxu0 0
    %312 = vmatpush1.bf16.msra.mxu0 %v234
    %313 = vmatprep.subr.bf16.mxu0 0
    %314 = vmatpush1.bf16.msra.mxu0 0
    %315 = vmatprep.subr.bf16.mxu0 0
    %316 = vmatpush1.bf16.msra.mxu0 0
    %317 = vmatprep.subr.bf16.mxu0 0
    %318 = vmatpush1.bf16.msra.mxu0 0
    %319 = vmatprep.subr.bf16.mxu0 0
    %320 = vmatpush1.bf16.msra.mxu0 0
    %321 = vmatprep.subr.bf16.mxu0 0
    %322 = vmatpush1.bf16.msra.mxu0 0
    %323 = vmatprep.subr.bf16.mxu0 0
    %324 = vmatpush1.bf16.msra.mxu0 0
    %325 = vmatprep.subr.bf16.mxu0 0
    %326 = vmatpush1.bf16.msra.mxu0 0
    %327 = vmatprep.subr.bf16.mxu0 0
    %328 = vmatpush1.bf16.msra.mxu0 0
    %329 = vmatprep.subr.bf16.mxu0 0
    %330 = vmatpush1.bf16.msra.mxu0 0
    %331 = vmatprep.subr.bf16.mxu0 0
    %332 = vmatpush1.bf16.msra.mxu0 0
    %333 = vmatprep.subr.bf16.mxu0 0
    %334 = vmatpush1.bf16.msra.mxu0 0
    %335 = vmatprep.subr.bf16.mxu0 0
    %336 = vmatpush1.bf16.msra.mxu0 0
    %337 = vmatprep.subr.bf16.mxu0 0
    %338 = vmatpush1.bf16.msra.mxu0 0
    %339 = vmatprep.subr.bf16.mxu0 0
    %340 = vmatpush1.bf16.msra.mxu0 0
    %341 = vmatprep.mubr.bf16.mxu0 0
    %342 = vmatmul.mubr.bf16.gmra.mrb[0].mxu0 %v215
    %v343 = vpop.f32.mrb[0].mxu0
    %v344 = vadd.f32 %v132, %v343
    %v345 = vpop.f32.mrb[0].mxu0
    %v346 = vpop.f32.mrb[0].mxu0
    %v347 = vadd.f32 %v137, %v346
    %v348 = vpop.f32.mrb[0].mxu0
    %349 = vmatprep.mubr.bf16.mxu0 0
    %350 = vmatmul.mubr.bf16.gmra.mrb[0].mxu0 %v218
    %v351 = vpop.f32.mrb[0].mxu0
    %v352 = vadd.f32 %v142, %v351
    %v353 = vpop.f32.mrb[0].mxu0
    %v354 = vpop.f32.mrb[0].mxu0
    %v355 = vadd.f32 %v147, %v354
    %v356 = vpop.f32.mrb[0].mxu0
    %357 = vmatprep.mubr.bf16.mxu0 0
    %358 = vmatmul.mubr.bf16.gmra.mrb[0].mxu0 %v221
    %v359 = vpop.f32.mrb[0].mxu0
    %v360 = vadd.f32 %v152, %v359
    %v361 = vpop.f32.mrb[0].mxu0
    %v362 = vpop.f32.mrb[0].mxu0
    %v363 = vadd.f32 %v157, %v362
    %v364 = vpop.f32.mrb[0].mxu0
    %365 = vmatprep.mubr.bf16.mxu0 0
    %366 = vmatmul.mubr.bf16.gmra.mrb[0].mxu0 %v224
    %v367 = vpop.f32.mrb[0].mxu0
    %v368 = vadd.f32 %v162, %v367
    %v369 = vpop.f32.mrb[0].mxu0
    %v370 = vpop.f32.mrb[0].mxu0
    %v371 = vadd.f32 %v167, %v370
    %v372 = vpop.f32.mrb[0].mxu0
    %373 = vdwg.mxu0
    %v374 = vpack.c.bf16 %v275, %v271
    %v375 = vpack.c.bf16 %v277, %v273
    %v376 = vpack.c.bf16 %v347, %v344
    %v377 = vpack.c.bf16 %v285, %v281
    %v378 = vpack.c.bf16 %v287, %v283
    %v379 = vpack.c.bf16 %v355, %v352
    %v380 = vpack.c.bf16 %v295, %v291
    %v381 = vpack.c.bf16 %v297, %v293
    %v382 = vpack.c.bf16 %v363, %v360
    %v383 = vpack.c.bf16 %v305, %v301
    %v384 = vpack.c.bf16 %v307, %v303
    %v385 = vpack.c.bf16 %v371, %v368
    %vm386 = vcmp.ge.bf16.partialorder %v374, 0
    %vm387 = vcmp.ge.bf16.partialorder %v375, 0
    %vm388 = vcmp.ge.bf16.partialorder %v376, 0
    %vm389 = vcmp.ge.bf16.partialorder %v377, 0
    %vm390 = vcmp.ge.bf16.partialorder %v378, 0
    %vm391 = vcmp.ge.bf16.partialorder %v379, 0
    %vm392 = vcmp.ge.bf16.partialorder %v380, 0
    %vm393 = vcmp.ge.bf16.partialorder %v381, 0
    %vm394 = vcmp.ge.bf16.partialorder %v382, 0
    %vm395 = vcmp.ge.bf16.partialorder %v383, 0
    %vm396 = vcmp.ge.bf16.partialorder %v384, 0
    %vm397 = vcmp.ge.bf16.partialorder %v385, 0
    %v398 = vmul.bf16 %v374, 1047215723
    %v399 = vmul.bf16 %v375, 1047215723
    %v400 = vmul.bf16 %v376, 1047215723
    %v401 = vmul.bf16 %v377, 1047215723
    %v402 = vmul.bf16 %v378, 1047215723
    %v403 = vmul.bf16 %v379, 1047215723
    %v404 = vmul.bf16 %v380, 1047215723
    %v405 = vmul.bf16 %v381, 1047215723
    %v406 = vmul.bf16 %v382, 1047215723
    %v407 = vmul.bf16 %v383, 1047215723
    %v408 = vmul.bf16 %v384, 1047215723
    %v409 = vmul.bf16 %v385, 1047215723
    %v410 = vsel %vm386, %v374, %v398
    %v411 = vsel %vm387, %v375, %v399
    %v412 = vsel %vm388, %v376, %v400
    %v413 = vsel %vm389, %v377, %v401
    %v414 = vsel %vm390, %v378, %v402
    %v415 = vsel %vm391, %v379, %v403
    %v416 = vsel %vm392, %v380, %v404
    %v417 = vsel %vm393, %v381, %v405
    %v418 = vsel %vm394, %v382, %v406
    %v419 = vsel %vm395, %v383, %v407
    %v420 = vsel %vm396, %v384, %v408
    %v421 = vsel %vm397, %v385, %v409
    %423 = vset.pattern.permute.xlu0 0
    %424 = vperm.xlu0 %423, %v93
    %v425 = vpop.permute.xlu0 %424
    %428 = vset.pattern.permute.xlu0 0
    %429 = vperm.xlu0 %428, %v94
    %v430 = vpop.permute.xlu0 %429
    %433 = vset.pattern.permute.xlu0 0
    %434 = vperm.xlu0 %433, %v95
    %v435 = vpop.permute.xlu0 %434
    %438 = vset.pattern.permute.xlu0 0
    %439 = vperm.xlu0 %438, %v96
    %v440 = vpop.permute.xlu0 %439
    %443 = vset.pattern.permute.xlu0 0
    %444 = vperm.xlu0 %443, %v97
    %v445 = vpop.permute.xlu0 %444
    %448 = vset.pattern.permute.xlu0 0
    %449 = vperm.xlu0 %448, %v98
    %v450 = vpop.permute.xlu0 %449
    %453 = vset.pattern.permute.xlu0 0
    %454 = vperm.xlu0 %453, %v99
    %v455 = vpop.permute.xlu0 %454
    %458 = vset.pattern.permute.xlu0 0
    %459 = vperm.xlu0 %458, %v100
    %v460 = vpop.permute.xlu0 %459
    %463 = vset.pattern.permute.xlu0 0
    %464 = vperm.xlu0 %463, %v101
    %v465 = vpop.permute.xlu0 %464
    %468 = vset.pattern.permute.xlu0 0
    %469 = vperm.xlu0 %468, %v102
    %v470 = vpop.permute.xlu0 %469
    %473 = vset.pattern.permute.xlu0 0
    %474 = vperm.xlu0 %473, %v103
    %v475 = vpop.permute.xlu0 %474
    %478 = vset.pattern.permute.xlu0 0
    %479 = vperm.xlu0 %478, %v104
    %v480 = vpop.permute.xlu0 %479
    %483 = vset.pattern.permute.xlu0 0
    %484 = vperm.xlu0 %483, %v105
    %v485 = vpop.permute.xlu0 %484
    %488 = vset.pattern.permute.xlu0 0
    %489 = vperm.xlu0 %488, %v106
    %v490 = vpop.permute.xlu0 %489
    %493 = vset.pattern.permute.xlu0 0
    %494 = vperm.xlu0 %493, %v107
    %v495 = vpop.permute.xlu0 %494
    %498 = vset.pattern.permute.xlu0 0
    %499 = vperm.xlu0 %498, %v108
    %v500 = vpop.permute.xlu0 %499
    %v518 = vunpack.c.l.b16 %v55
    %v519 = vunpack.c.l.b16 %v56
    %v520 = vunpack.c.l.b16 %v57
    %v521 = vunpack.c.l.b16 %v58
    %v522 = vunpack.c.l.b16 %v59
    %v523 = vunpack.c.l.b16 %v60
    %v524 = vunpack.c.l.b16 %v61
    %v525 = vunpack.c.l.b16 %v62
    %v526 = vunpack.c.l.b16 %v63
    %v527 = vunpack.c.l.b16 %v64
    %v528 = vunpack.c.l.b16 %v65
    %v529 = vunpack.c.l.b16 %v66
    %v530 = vunpack.c.l.b16 %v67
    %v531 = vunpack.c.l.b16 %v68
    %v532 = vunpack.c.l.b16 %v69
    %v533 = vunpack.c.l.b16 %v70
    %v534 = vpack.c.b16 %v519, %v518
    %v535 = vpack.c.b16 %v521, %v520
    %v536 = vpack.c.b16 %v523, %v522
    %v537 = vpack.c.b16 %v525, %v524
    %v538 = vpack.c.b16 %v527, %v526
    %v539 = vpack.c.b16 %v529, %v528
    %v540 = vpack.c.b16 %v531, %v530
    %v541 = vpack.c.b16 %v533, %v532
    %vm542 = vcmask 523264
    %v544 = vsel %vm542, %v534, 0
    %v547 = vsel %vm542, %v535, 0
    %v550 = vsel %vm542, %v536, 0
    %v553 = vsel %vm542, %v537, 0
    %v556 = vsel %vm542, %v538, 0
    %v559 = vsel %vm542, %v539, 0
    %v562 = vsel %vm542, %v540, 0
    %v565 = vsel %vm542, %v541, 0
    %567 = vmatprep.subr.bf16.mxu0 %v411
    %568 = vmatpush1.bf16.msra.mxu0 %v410
    %569 = vmatprep.subr.bf16.mxu0 %v414
    %570 = vmatpush1.bf16.msra.mxu0 %v413
    %571 = vmatprep.subr.bf16.mxu0 %v417
    %572 = vmatpush1.bf16.msra.mxu0 %v416
    %573 = vmatprep.subr.bf16.mxu0 %v420
    %574 = vmatpush1.bf16.msra.mxu0 %v419
    %575 = vmatprep.subr.bf16.mxu0 0
    %576 = vmatpush1.bf16.msra.mxu0 0
    %577 = vmatprep.subr.bf16.mxu0 0
    %578 = vmatpush1.bf16.msra.mxu0 0
    %579 = vmatprep.subr.bf16.mxu0 0
    %580 = vmatpush1.bf16.msra.mxu0 0
    %581 = vmatprep.subr.bf16.mxu0 0
    %582 = vmatpush1.bf16.msra.mxu0 0
    %583 = vmatprep.subr.bf16.mxu0 0
    %584 = vmatpush1.bf16.msra.mxu0 0
    %585 = vmatprep.subr.bf16.mxu0 0
    %586 = vmatpush1.bf16.msra.mxu0 0
    %587 = vmatprep.subr.bf16.mxu0 0
    %588 = vmatpush1.bf16.msra.mxu0 0
    %589 = vmatprep.subr.bf16.mxu0 0
    %590 = vmatpush1.bf16.msra.mxu0 0
    %591 = vmatprep.subr.bf16.mxu0 0
    %592 = vmatpush1.bf16.msra.mxu0 0
    %593 = vmatprep.subr.bf16.mxu0 0
    %594 = vmatpush1.bf16.msra.mxu0 0
    %595 = vmatprep.subr.bf16.mxu0 0
    %596 = vmatpush1.bf16.msra.mxu0 0
    %597 = vmatprep.subr.bf16.mxu0 0
    %598 = vmatpush1.bf16.msra.mxu0 0
    %599 = vmatprep.mubr.bf16.mxu0 0
    %600 = vmatmul.mubr.bf16.gmra.mrb[0].mxu0 %v544
    %v601 = vpop.f32.mrb[0].mxu0
    %v602 = vadd.f32 %v425, %v601
    %v603 = vpop.f32.mrb[0].mxu0
    %v604 = vadd.f32 %v425, %v603
    %v605 = vpop.f32.mrb[0].mxu0
    %v606 = vadd.f32 %v430, %v605
    %v607 = vpop.f32.mrb[0].mxu0
    %v608 = vadd.f32 %v430, %v607
    %609 = vmatprep.mubr.bf16.mxu0 0
    %610 = vmatmul.mubr.bf16.gmra.mrb[0].mxu0 %v547
    %v611 = vpop.f32.mrb[0].mxu0
    %v612 = vadd.f32 %v435, %v611
    %v613 = vpop.f32.mrb[0].mxu0
    %v614 = vadd.f32 %v435, %v613
    %v615 = vpop.f32.mrb[0].mxu0
    %v616 = vadd.f32 %v440, %v615
    %v617 = vpop.f32.mrb[0].mxu0
    %v618 = vadd.f32 %v440, %v617
    %619 = vmatprep.mubr.bf16.mxu0 0
    %620 = vmatmul.mubr.bf16.gmra.mrb[0].mxu0 %v550
    %v621 = vpop.f32.mrb[0].mxu0
    %v622 = vadd.f32 %v445, %v621
    %v623 = vpop.f32.mrb[0].mxu0
    %v624 = vadd.f32 %v445, %v623
    %v625 = vpop.f32.mrb[0].mxu0
    %v626 = vadd.f32 %v450, %v625
    %v627 = vpop.f32.mrb[0].mxu0
    %v628 = vadd.f32 %v450, %v627
    %629 = vmatprep.mubr.bf16.mxu0 0
    %630 = vmatmul.mubr.bf16.gmra.mrb[0].mxu0 %v553
    %v631 = vpop.f32.mrb[0].mxu0
    %v632 = vadd.f32 %v455, %v631
    %v633 = vpop.f32.mrb[0].mxu0
    %v634 = vadd.f32 %v455, %v633
    %v635 = vpop.f32.mrb[0].mxu0
    %v636 = vadd.f32 %v460, %v635
    %v637 = vpop.f32.mrb[0].mxu0
    %v638 = vadd.f32 %v460, %v637
    %639 = vmatprep.mubr.bf16.mxu0 0
    %640 = vmatmul.mubr.bf16.gmra.mrb[0].mxu0 %v556
    %v641 = vpop.f32.mrb[0].mxu0
    %v642 = vadd.f32 %v465, %v641
    %v643 = vpop.f32.mrb[0].mxu0
    %v644 = vadd.f32 %v465, %v643
    %v645 = vpop.f32.mrb[0].mxu0
    %v646 = vadd.f32 %v470, %v645
    %v647 = vpop.f32.mrb[0].mxu0
    %v648 = vadd.f32 %v470, %v647
    %649 = vmatprep.mubr.bf16.mxu0 0
    %650 = vmatmul.mubr.bf16.gmra.mrb[0].mxu0 %v559
    %v651 = vpop.f32.mrb[0].mxu0
    %v652 = vadd.f32 %v475, %v651
    %v653 = vpop.f32.mrb[0].mxu0
    %v654 = vadd.f32 %v475, %v653
    %v655 = vpop.f32.mrb[0].mxu0
    %v656 = vadd.f32 %v480, %v655
    %v657 = vpop.f32.mrb[0].mxu0
    %v658 = vadd.f32 %v480, %v657
    %659 = vmatprep.mubr.bf16.mxu0 0
    %660 = vmatmul.mubr.bf16.gmra.mrb[0].mxu0 %v562
    %v661 = vpop.f32.mrb[0].mxu0
    %v662 = vadd.f32 %v485, %v661
    %v663 = vpop.f32.mrb[0].mxu0
    %v664 = vadd.f32 %v485, %v663
    %v665 = vpop.f32.mrb[0].mxu0
    %v666 = vadd.f32 %v490, %v665
    %v667 = vpop.f32.mrb[0].mxu0
    %v668 = vadd.f32 %v490, %v667
    %669 = vmatprep.mubr.bf16.mxu0 0
    %670 = vmatmul.mubr.bf16.gmra.mrb[0].mxu0 %v565
    %v671 = vpop.f32.mrb[0].mxu0
    %v672 = vadd.f32 %v495, %v671
    %v673 = vpop.f32.mrb[0].mxu0
    %v674 = vadd.f32 %v495, %v673
    %v675 = vpop.f32.mrb[0].mxu0
    %v676 = vadd.f32 %v500, %v675
    %v677 = vpop.f32.mrb[0].mxu0
    %v678 = vadd.f32 %v500, %v677
    %679 = vdwg.mxu0
    %680 = vmatprep.subr.bf16.mxu0 0
    %681 = vmatpush1.bf16.msra.mxu0 %v412
    %682 = vmatprep.subr.bf16.mxu0 0
    %683 = vmatpush1.bf16.msra.mxu0 %v415
    %684 = vmatprep.subr.bf16.mxu0 0
    %685 = vmatpush1.bf16.msra.mxu0 %v418
    %686 = vmatprep.subr.bf16.mxu0 0
    %687 = vmatpush1.bf16.msra.mxu0 %v421
    %688 = vmatprep.subr.bf16.mxu0 0
    %689 = vmatpush1.bf16.msra.mxu0 0
    %690 = vmatprep.subr.bf16.mxu0 0
    %691 = vmatpush1.bf16.msra.mxu0 0
    %692 = vmatprep.subr.bf16.mxu0 0
    %693 = vmatpush1.bf16.msra.mxu0 0
    %694 = vmatprep.subr.bf16.mxu0 0
    %695 = vmatpush1.bf16.msra.mxu0 0
    %696 = vmatprep.subr.bf16.mxu0 0
    %697 = vmatpush1.bf16.msra.mxu0 0
    %698 = vmatprep.subr.bf16.mxu0 0
    %699 = vmatpush1.bf16.msra.mxu0 0
    %700 = vmatprep.subr.bf16.mxu0 0
    %701 = vmatpush1.bf16.msra.mxu0 0
    %702 = vmatprep.subr.bf16.mxu0 0
    %703 = vmatpush1.bf16.msra.mxu0 0
    %704 = vmatprep.subr.bf16.mxu0 0
    %705 = vmatpush1.bf16.msra.mxu0 0
    %706 = vmatprep.subr.bf16.mxu0 0
    %707 = vmatpush1.bf16.msra.mxu0 0
    %708 = vmatprep.subr.bf16.mxu0 0
    %709 = vmatpush1.bf16.msra.mxu0 0
    %710 = vmatprep.subr.bf16.mxu0 0
    %711 = vmatpush1.bf16.msra.mxu0 0
    %712 = vmatprep.mubr.bf16.mxu0 0
    %713 = vmatmul.mubr.bf16.gmra.mrb[0].mxu0 %v544
    %v714 = vpop.f32.mrb[0].mxu0
    %v715 = vadd.f32 %v425, %v714
    %v716 = vpop.f32.mrb[0].mxu0
    %v717 = vpop.f32.mrb[0].mxu0
    %v718 = vadd.f32 %v430, %v717
    %v719 = vpop.f32.mrb[0].mxu0
    %720 = vmatprep.mubr.bf16.mxu0 0
    %721 = vmatmul.mubr.bf16.gmra.mrb[0].mxu0 %v547
    %v722 = vpop.f32.mrb[0].mxu0
    %v723 = vadd.f32 %v435, %v722
    %v724 = vpop.f32.mrb[0].mxu0
    %v725 = vpop.f32.mrb[0].mxu0
    %v726 = vadd.f32 %v440, %v725
    %v727 = vpop.f32.mrb[0].mxu0
    %728 = vmatprep.mubr.bf16.mxu0 0
    %729 = vmatmul.mubr.bf16.gmra.mrb[0].mxu0 %v550
    %v730 = vpop.f32.mrb[0].mxu0
    %v731 = vadd.f32 %v445, %v730
    %v732 = vpop.f32.mrb[0].mxu0
    %v733 = vpop.f32.mrb[0].mxu0
    %v734 = vadd.f32 %v450, %v733
    %v735 = vpop.f32.mrb[0].mxu0
    %736 = vmatprep.mubr.bf16.mxu0 0
    %737 = vmatmul.mubr.bf16.gmra.mrb[0].mxu0 %v553
    %v738 = vpop.f32.mrb[0].mxu0
    %v739 = vadd.f32 %v455, %v738
    %v740 = vpop.f32.mrb[0].mxu0
    %v741 = vpop.f32.mrb[0].mxu0
    %v742 = vadd.f32 %v460, %v741
    %v743 = vpop.f32.mrb[0].mxu0
    %744 = vmatprep.mubr.bf16.mxu0 0
    %745 = vmatmul.mubr.bf16.gmra.mrb[0].mxu0 %v556
    %v746 = vpop.f32.mrb[0].mxu0
    %v747 = vadd.f32 %v465, %v746
    %v748 = vpop.f32.mrb[0].mxu0
    %v749 = vpop.f32.mrb[0].mxu0
    %v750 = vadd.f32 %v470, %v749
    %v751 = vpop.f32.mrb[0].mxu0
    %752 = vmatprep.mubr.bf16.mxu0 0
    %753 = vmatmul.mubr.bf16.gmra.mrb[0].mxu0 %v559
    %v754 = vpop.f32.mrb[0].mxu0
    %v755 = vadd.f32 %v475, %v754
    %v756 = vpop.f32.mrb[0].mxu0
    %v757 = vpop.f32.mrb[0].mxu0
    %v758 = vadd.f32 %v480, %v757
    %v759 = vpop.f32.mrb[0].mxu0
    %760 = vmatprep.mubr.bf16.mxu0 0
    %761 = vmatmul.mubr.bf16.gmra.mrb[0].mxu0 %v562
    %v762 = vpop.f32.mrb[0].mxu0
    %v763 = vadd.f32 %v485, %v762
    %v764 = vpop.f32.mrb[0].mxu0
    %v765 = vpop.f32.mrb[0].mxu0
    %v766 = vadd.f32 %v490, %v765
    %v767 = vpop.f32.mrb[0].mxu0
    %768 = vmatprep.mubr.bf16.mxu0 0
    %769 = vmatmul.mubr.bf16.gmra.mrb[0].mxu0 %v565
    %v770 = vpop.f32.mrb[0].mxu0
    %v771 = vadd.f32 %v495, %v770
    %v772 = vpop.f32.mrb[0].mxu0
    %v773 = vpop.f32.mrb[0].mxu0
    %v774 = vadd.f32 %v500, %v773
    %v775 = vpop.f32.mrb[0].mxu0
    %776 = vdwg.mxu0
    %v777 = vpack.c.bf16 %v606, %v602
    %v778 = vpack.c.bf16 %v608, %v604
    %v779 = vpack.c.bf16 %v718, %v715
    %v780 = vpack.c.bf16 %v616, %v612
    %v781 = vpack.c.bf16 %v618, %v614
    %v782 = vpack.c.bf16 %v726, %v723
    %v783 = vpack.c.bf16 %v626, %v622
    %v784 = vpack.c.bf16 %v628, %v624
    %v785 = vpack.c.bf16 %v734, %v731
    %v786 = vpack.c.bf16 %v636, %v632
    %v787 = vpack.c.bf16 %v638, %v634
    %v788 = vpack.c.bf16 %v742, %v739
    %v789 = vpack.c.bf16 %v646, %v642
    %v790 = vpack.c.bf16 %v648, %v644
    %v791 = vpack.c.bf16 %v750, %v747
    %v792 = vpack.c.bf16 %v656, %v652
    %v793 = vpack.c.bf16 %v658, %v654
    %v794 = vpack.c.bf16 %v758, %v755
    %v795 = vpack.c.bf16 %v666, %v662
    %v796 = vpack.c.bf16 %v668, %v664
    %v797 = vpack.c.bf16 %v766, %v763
    %v798 = vpack.c.bf16 %v676, %v672
    %v799 = vpack.c.bf16 %v678, %v674
    %v800 = vpack.c.bf16 %v774, %v771
    %vm801 = vcmp.ge.bf16.partialorder %v777, 0
    %vm802 = vcmp.ge.bf16.partialorder %v778, 0
    %vm803 = vcmp.ge.bf16.partialorder %v779, 0
    %vm804 = vcmp.ge.bf16.partialorder %v780, 0
    %vm805 = vcmp.ge.bf16.partialorder %v781, 0
    %vm806 = vcmp.ge.bf16.partialorder %v782, 0
    %vm807 = vcmp.ge.bf16.partialorder %v783, 0
    %vm808 = vcmp.ge.bf16.partialorder %v784, 0
    %vm809 = vcmp.ge.bf16.partialorder %v785, 0
    %vm810 = vcmp.ge.bf16.partialorder %v786, 0
    %vm811 = vcmp.ge.bf16.partialorder %v787, 0
    %vm812 = vcmp.ge.bf16.partialorder %v788, 0
    %vm813 = vcmp.ge.bf16.partialorder %v789, 0
    %vm814 = vcmp.ge.bf16.partialorder %v790, 0
    %vm815 = vcmp.ge.bf16.partialorder %v791, 0
    %vm816 = vcmp.ge.bf16.partialorder %v792, 0
    %vm817 = vcmp.ge.bf16.partialorder %v793, 0
    %vm818 = vcmp.ge.bf16.partialorder %v794, 0
    %vm819 = vcmp.ge.bf16.partialorder %v795, 0
    %vm820 = vcmp.ge.bf16.partialorder %v796, 0
    %vm821 = vcmp.ge.bf16.partialorder %v797, 0
    %vm822 = vcmp.ge.bf16.partialorder %v798, 0
    %vm823 = vcmp.ge.bf16.partialorder %v799, 0
    %vm824 = vcmp.ge.bf16.partialorder %v800, 0
    %v825 = vmul.bf16 %v777, 1047215723
    %v826 = vmul.bf16 %v778, 1047215723
    %v827 = vmul.bf16 %v779, 1047215723
    %v828 = vmul.bf16 %v780, 1047215723
    %v829 = vmul.bf16 %v781, 1047215723
    %v830 = vmul.bf16 %v782, 1047215723
    %v831 = vmul.bf16 %v783, 1047215723
    %v832 = vmul.bf16 %v784, 1047215723
    %v833 = vmul.bf16 %v785, 1047215723
    %v834 = vmul.bf16 %v786, 1047215723
    %v835 = vmul.bf16 %v787, 1047215723
    %v836 = vmul.bf16 %v788, 1047215723
    %v837 = vmul.bf16 %v789, 1047215723
    %v838 = vmul.bf16 %v790, 1047215723
    %v839 = vmul.bf16 %v791, 1047215723
    %v840 = vmul.bf16 %v792, 1047215723
    %v841 = vmul.bf16 %v793, 1047215723
    %v842 = vmul.bf16 %v794, 1047215723
    %v843 = vmul.bf16 %v795, 1047215723
    %v844 = vmul.bf16 %v796, 1047215723
    %v845 = vmul.bf16 %v797, 1047215723
    %v846 = vmul.bf16 %v798, 1047215723
    %v847 = vmul.bf16 %v799, 1047215723
    %v848 = vmul.bf16 %v800, 1047215723
    %v849 = vsel %vm801, %v777, %v825
    %v850 = vsel %vm802, %v778, %v826
    %v851 = vsel %vm803, %v779, %v827
    %v852 = vsel %vm804, %v780, %v828
    %v853 = vsel %vm805, %v781, %v829
    %v854 = vsel %vm806, %v782, %v830
    %v855 = vsel %vm807, %v783, %v831
    %v856 = vsel %vm808, %v784, %v832
    %v857 = vsel %vm809, %v785, %v833
    %v858 = vsel %vm810, %v786, %v834
    %v859 = vsel %vm811, %v787, %v835
    %v860 = vsel %vm812, %v788, %v836
    %v861 = vsel %vm813, %v789, %v837
    %v862 = vsel %vm814, %v790, %v838
    %v863 = vsel %vm815, %v791, %v839
    %v864 = vsel %vm816, %v792, %v840
    %v865 = vsel %vm817, %v793, %v841
    %v866 = vsel %vm818, %v794, %v842
    %v867 = vsel %vm819, %v795, %v843
    %v868 = vsel %vm820, %v796, %v844
    %v869 = vsel %vm821, %v797, %v845
    %v870 = vsel %vm822, %v798, %v846
    %v871 = vsel %vm823, %v799, %v847
    %v872 = vsel %vm824, %v800, %v848
    %874 = vset.pattern.permute.xlu0 0
    %875 = vperm.xlu0 %874, %v109
    %v876 = vpop.permute.xlu0 %875
    %879 = vset.pattern.permute.xlu0 0
    %880 = vperm.xlu0 %879, %v110
    %v881 = vpop.permute.xlu0 %880
    %884 = vset.pattern.permute.xlu0 0
    %885 = vperm.xlu0 %884, %v111
    %v886 = vpop.permute.xlu0 %885
    %889 = vset.pattern.permute.xlu0 0
    %890 = vperm.xlu0 %889, %v112
    %v891 = vpop.permute.xlu0 %890
    %894 = vset.pattern.permute.xlu0 0
    %895 = vperm.xlu0 %894, %v113
    %v896 = vpop.permute.xlu0 %895
    %899 = vset.pattern.permute.xlu0 0
    %900 = vperm.xlu0 %899, %v114
    %v901 = vpop.permute.xlu0 %900
    %904 = vset.pattern.permute.xlu0 0
    %905 = vperm.xlu0 %904, %v115
    %v906 = vpop.permute.xlu0 %905
    %909 = vset.pattern.permute.xlu0 0
    %910 = vperm.xlu0 %909, %v116
    %v911 = vpop.permute.xlu0 %910
    %v921 = vunpack.c.l.b16 %v71
    %v922 = vunpack.c.l.b16 %v72
    %v923 = vunpack.c.l.b16 %v73
    %v924 = vunpack.c.l.b16 %v74
    %v925 = vunpack.c.l.b16 %v75
    %v926 = vunpack.c.l.b16 %v76
    %v927 = vunpack.c.l.b16 %v77
    %v928 = vunpack.c.l.b16 %v78
    %v929 = vpack.c.b16 %v922, %v921
    %v930 = vpack.c.b16 %v924, %v923
    %v931 = vpack.c.b16 %v926, %v925
    %v932 = vpack.c.b16 %v928, %v927
    %937 = vmatprep.subr.bf16.mxu0 %v850
    %938 = vmatpush1.bf16.msra.mxu0 %v849
    %939 = vmatprep.subr.bf16.mxu0 %v853
    %940 = vmatpush1.bf16.msra.mxu0 %v852
    %941 = vmatprep.subr.bf16.mxu0 %v856
    %942 = vmatpush1.bf16.msra.mxu0 %v855
    %943 = vmatprep.subr.bf16.mxu0 %v859
    %944 = vmatpush1.bf16.msra.mxu0 %v858
    %945 = vmatprep.subr.bf16.mxu0 %v862
    %946 = vmatpush1.bf16.msra.mxu0 %v861
    %947 = vmatprep.subr.bf16.mxu0 %v865
    %948 = vmatpush1.bf16.msra.mxu0 %v864
    %949 = vmatprep.subr.bf16.mxu0 %v868
    %950 = vmatpush1.bf16.msra.mxu0 %v867
    %951 = vmatprep.subr.bf16.mxu0 %v871
    %952 = vmatpush1.bf16.msra.mxu0 %v870
    %953 = vmatprep.subr.bf16.mxu0 0
    %954 = vmatpush1.bf16.msra.mxu0 0
    %955 = vmatprep.subr.bf16.mxu0 0
    %956 = vmatpush1.bf16.msra.mxu0 0
    %957 = vmatprep.subr.bf16.mxu0 0
    %958 = vmatpush1.bf16.msra.mxu0 0
    %959 = vmatprep.subr.bf16.mxu0 0
    %960 = vmatpush1.bf16.msra.mxu0 0
    %961 = vmatprep.subr.bf16.mxu0 0
    %962 = vmatpush1.bf16.msra.mxu0 0
    %963 = vmatprep.subr.bf16.mxu0 0
    %964 = vmatpush1.bf16.msra.mxu0 0
    %965 = vmatprep.subr.bf16.mxu0 0
    %966 = vmatpush1.bf16.msra.mxu0 0
    %967 = vmatprep.subr.bf16.mxu0 0
    %968 = vmatpush1.bf16.msra.mxu0 0
    %969 = vmatprep.mubr.bf16.mxu0 0
    %970 = vmatmul.mubr.bf16.gmra.mrb[0].mxu0 %v929
    %v971 = vpop.f32.mrb[0].mxu0
    %v972 = vadd.f32 %v876, %v971
    %v973 = vpop.f32.mrb[0].mxu0
    %v974 = vadd.f32 %v876, %v973
    %v975 = vpop.f32.mrb[0].mxu0
    %v976 = vadd.f32 %v881, %v975
    %v977 = vpop.f32.mrb[0].mxu0
    %v978 = vadd.f32 %v881, %v977
    %979 = vmatprep.mubr.bf16.mxu0 0
    %980 = vmatmul.mubr.bf16.gmra.mrb[0].mxu0 %v930
    %v981 = vpop.f32.mrb[0].mxu0
    %v982 = vadd.f32 %v886, %v981
    %v983 = vpop.f32.mrb[0].mxu0
    %v984 = vadd.f32 %v886, %v983
    %v985 = vpop.f32.mrb[0].mxu0
    %v986 = vadd.f32 %v891, %v985
    %v987 = vpop.f32.mrb[0].mxu0
    %v988 = vadd.f32 %v891, %v987
    %989 = vmatprep.mubr.bf16.mxu0 0
    %990 = vmatmul.mubr.bf16.gmra.mrb[0].mxu0 %v931
    %v991 = vpop.f32.mrb[0].mxu0
    %v992 = vadd.f32 %v896, %v991
    %v993 = vpop.f32.mrb[0].mxu0
    %v994 = vadd.f32 %v896, %v993
    %v995 = vpop.f32.mrb[0].mxu0
    %v996 = vadd.f32 %v901, %v995
    %v997 = vpop.f32.mrb[0].mxu0
    %v998 = vadd.f32 %v901, %v997
    %999 = vmatprep.mubr.bf16.mxu0 0
    %1000 = vmatmul.mubr.bf16.gmra.mrb[0].mxu0 %v932
    %v1001 = vpop.f32.mrb[0].mxu0
    %v1002 = vadd.f32 %v906, %v1001
    %v1003 = vpop.f32.mrb[0].mxu0
    %v1004 = vadd.f32 %v906, %v1003
    %v1005 = vpop.f32.mrb[0].mxu0
    %v1006 = vadd.f32 %v911, %v1005
    %v1007 = vpop.f32.mrb[0].mxu0
    %v1008 = vadd.f32 %v911, %v1007
    %1009 = vdwg.mxu0
    %1010 = vmatprep.subr.bf16.mxu0 0
    %1011 = vmatpush1.bf16.msra.mxu0 %v851
    %1012 = vmatprep.subr.bf16.mxu0 0
    %1013 = vmatpush1.bf16.msra.mxu0 %v854
    %1014 = vmatprep.subr.bf16.mxu0 0
    %1015 = vmatpush1.bf16.msra.mxu0 %v857
    %1016 = vmatprep.subr.bf16.mxu0 0
    %1017 = vmatpush1.bf16.msra.mxu0 %v860
    %1018 = vmatprep.subr.bf16.mxu0 0
    %1019 = vmatpush1.bf16.msra.mxu0 %v863
    %1020 = vmatprep.subr.bf16.mxu0 0
    %1021 = vmatpush1.bf16.msra.mxu0 %v866
    %1022 = vmatprep.subr.bf16.mxu0 0
    %1023 = vmatpush1.bf16.msra.mxu0 %v869
    %1024 = vmatprep.subr.bf16.mxu0 0
    %1025 = vmatpush1.bf16.msra.mxu0 %v872
    %1026 = vmatprep.subr.bf16.mxu0 0
    %1027 = vmatpush1.bf16.msra.mxu0 0
    %1028 = vmatprep.subr.bf16.mxu0 0
    %1029 = vmatpush1.bf16.msra.mxu0 0
    %1030 = vmatprep.subr.bf16.mxu0 0
    %1031 = vmatpush1.bf16.msra.mxu0 0
    %1032 = vmatprep.subr.bf16.mxu0 0
    %1033 = vmatpush1.bf16.msra.mxu0 0
    %1034 = vmatprep.subr.bf16.mxu0 0
    %1035 = vmatpush1.bf16.msra.mxu0 0
    %1036 = vmatprep.subr.bf16.mxu0 0
    %1037 = vmatpush1.bf16.msra.mxu0 0
    %1038 = vmatprep.subr.bf16.mxu0 0
    %1039 = vmatpush1.bf16.msra.mxu0 0
    %1040 = vmatprep.subr.bf16.mxu0 0
    %1041 = vmatpush1.bf16.msra.mxu0 0
    %1042 = vmatprep.mubr.bf16.mxu0 0
    %1043 = vmatmul.mubr.bf16.gmra.mrb[0].mxu0 %v929
    %v1044 = vpop.f32.mrb[0].mxu0
    %v1045 = vadd.f32 %v876, %v1044
    %v1046 = vpop.f32.mrb[0].mxu0
    %v1047 = vpop.f32.mrb[0].mxu0
    %v1048 = vadd.f32 %v881, %v1047
    %v1049 = vpop.f32.mrb[0].mxu0
    %1050 = vmatprep.mubr.bf16.mxu0 0
    %1051 = vmatmul.mubr.bf16.gmra.mrb[0].mxu0 %v930
    %v1052 = vpop.f32.mrb[0].mxu0
    %v1053 = vadd.f32 %v886, %v1052
    %v1054 = vpop.f32.mrb[0].mxu0
    %v1055 = vpop.f32.mrb[0].mxu0
    %v1056 = vadd.f32 %v891, %v1055
    %v1057 = vpop.f32.mrb[0].mxu0
    %1058 = vmatprep.mubr.bf16.mxu0 0
    %1059 = vmatmul.mubr.bf16.gmra.mrb[0].mxu0 %v931
    %v1060 = vpop.f32.mrb[0].mxu0
    %v1061 = vadd.f32 %v896, %v1060
    %v1062 = vpop.f32.mrb[0].mxu0
    %v1063 = vpop.f32.mrb[0].mxu0
    %v1064 = vadd.f32 %v901, %v1063
    %v1065 = vpop.f32.mrb[0].mxu0
    %1066 = vmatprep.mubr.bf16.mxu0 0
    %1067 = vmatmul.mubr.bf16.gmra.mrb[0].mxu0 %v932
    %v1068 = vpop.f32.mrb[0].mxu0
    %v1069 = vadd.f32 %v906, %v1068
    %v1070 = vpop.f32.mrb[0].mxu0
    %v1071 = vpop.f32.mrb[0].mxu0
    %v1072 = vadd.f32 %v911, %v1071
    %v1073 = vpop.f32.mrb[0].mxu0
    %1074 = vdwg.mxu0
    %v1075 = vpack.c.bf16 %v976, %v972
    %v1076 = vpack.c.bf16 %v978, %v974
    %v1077 = vpack.c.bf16 %v1048, %v1045
    %v1078 = vpack.c.bf16 %v986, %v982
    %v1079 = vpack.c.bf16 %v988, %v984
    %v1080 = vpack.c.bf16 %v1056, %v1053
    %v1081 = vpack.c.bf16 %v996, %v992
    %v1082 = vpack.c.bf16 %v998, %v994
    %v1083 = vpack.c.bf16 %v1064, %v1061
    %v1084 = vpack.c.bf16 %v1006, %v1002
    %v1085 = vpack.c.bf16 %v1008, %v1004
    %v1086 = vpack.c.bf16 %v1072, %v1069
    %vm1087 = vcmp.ge.bf16.partialorder %v1075, 0
    %vm1088 = vcmp.ge.bf16.partialorder %v1076, 0
    %vm1089 = vcmp.ge.bf16.partialorder %v1077, 0
    %vm1090 = vcmp.ge.bf16.partialorder %v1078, 0
    %vm1091 = vcmp.ge.bf16.partialorder %v1079, 0
    %vm1092 = vcmp.ge.bf16.partialorder %v1080, 0
    %vm1093 = vcmp.ge.bf16.partialorder %v1081, 0
    %vm1094 = vcmp.ge.bf16.partialorder %v1082, 0
    %vm1095 = vcmp.ge.bf16.partialorder %v1083, 0
    %vm1096 = vcmp.ge.bf16.partialorder %v1084, 0
    %vm1097 = vcmp.ge.bf16.partialorder %v1085, 0
    %vm1098 = vcmp.ge.bf16.partialorder %v1086, 0
    %v1099 = vmul.bf16 %v1075, 1047215723
    %v1100 = vmul.bf16 %v1076, 1047215723
    %v1101 = vmul.bf16 %v1077, 1047215723
    %v1102 = vmul.bf16 %v1078, 1047215723
    %v1103 = vmul.bf16 %v1079, 1047215723
    %v1104 = vmul.bf16 %v1080, 1047215723
    %v1105 = vmul.bf16 %v1081, 1047215723
    %v1106 = vmul.bf16 %v1082, 1047215723
    %v1107 = vmul.bf16 %v1083, 1047215723
    %v1108 = vmul.bf16 %v1084, 1047215723
    %v1109 = vmul.bf16 %v1085, 1047215723
    %v1110 = vmul.bf16 %v1086, 1047215723
    %v1111 = vsel %vm1087, %v1075, %v1099
    %v1112 = vsel %vm1088, %v1076, %v1100
    %v1113 = vsel %vm1089, %v1077, %v1101
    %v1114 = vsel %vm1090, %v1078, %v1102
    %v1115 = vsel %vm1091, %v1079, %v1103
    %v1116 = vsel %vm1092, %v1080, %v1104
    %v1117 = vsel %vm1093, %v1081, %v1105
    %v1118 = vsel %vm1094, %v1082, %v1106
    %v1119 = vsel %vm1095, %v1083, %v1107
    %v1120 = vsel %vm1096, %v1084, %v1108
    %v1121 = vsel %vm1097, %v1085, %v1109
    %v1122 = vsel %vm1098, %v1086, %v1110
    %1124 = vset.pattern.permute.xlu0 0
    %1125 = vperm.xlu0 %1124, %v117
    %v1126 = vpop.permute.xlu0 %1125
    %1129 = vset.pattern.permute.xlu0 0
    %1130 = vperm.xlu0 %1129, %v118
    %v1131 = vpop.permute.xlu0 %1130
    %1134 = vset.pattern.permute.xlu0 0
    %1135 = vperm.xlu0 %1134, %v119
    %v1136 = vpop.permute.xlu0 %1135
    %1139 = vset.pattern.permute.xlu0 0
    %1140 = vperm.xlu0 %1139, %v120
    %v1141 = vpop.permute.xlu0 %1140
    %v1147 = vunpack.c.l.b16 %v79
    %v1148 = vunpack.c.l.b16 %v80
    %v1149 = vunpack.c.l.b16 %v81
    %v1150 = vunpack.c.l.b16 %v82
    %v1151 = vpack.c.b16 %v1148, %v1147
    %v1152 = vpack.c.b16 %v1150, %v1149
    %v1154 = vsel %vm542, %v1151, 0
    %v1157 = vsel %vm542, %v1152, 0
    %1159 = vmatprep.subr.bf16.mxu0 %v1112
    %1160 = vmatpush1.bf16.msra.mxu0 %v1111
    %1161 = vmatprep.subr.bf16.mxu0 %v1115
    %1162 = vmatpush1.bf16.msra.mxu0 %v1114
    %1163 = vmatprep.subr.bf16.mxu0 %v1118
    %1164 = vmatpush1.bf16.msra.mxu0 %v1117
    %1165 = vmatprep.subr.bf16.mxu0 %v1121
    %1166 = vmatpush1.bf16.msra.mxu0 %v1120
    %1167 = vmatprep.subr.bf16.mxu0 0
    %1168 = vmatpush1.bf16.msra.mxu0 0
    %1169 = vmatprep.subr.bf16.mxu0 0
    %1170 = vmatpush1.bf16.msra.mxu0 0
    %1171 = vmatprep.subr.bf16.mxu0 0
    %1172 = vmatpush1.bf16.msra.mxu0 0
    %1173 = vmatprep.subr.bf16.mxu0 0
    %1174 = vmatpush1.bf16.msra.mxu0 0
    %1175 = vmatprep.subr.bf16.mxu0 0
    %1176 = vmatpush1.bf16.msra.mxu0 0
    %1177 = vmatprep.subr.bf16.mxu0 0
    %1178 = vmatpush1.bf16.msra.mxu0 0
    %1179 = vmatprep.subr.bf16.mxu0 0
    %1180 = vmatpush1.bf16.msra.mxu0 0
    %1181 = vmatprep.subr.bf16.mxu0 0
    %1182 = vmatpush1.bf16.msra.mxu0 0
    %1183 = vmatprep.subr.bf16.mxu0 0
    %1184 = vmatpush1.bf16.msra.mxu0 0
    %1185 = vmatprep.subr.bf16.mxu0 0
    %1186 = vmatpush1.bf16.msra.mxu0 0
    %1187 = vmatprep.subr.bf16.mxu0 0
    %1188 = vmatpush1.bf16.msra.mxu0 0
    %1189 = vmatprep.subr.bf16.mxu0 0
    %1190 = vmatpush1.bf16.msra.mxu0 0
    %1191 = vmatprep.mubr.bf16.mxu0 0
    %1192 = vmatmul.mubr.bf16.gmra.mrb[0].mxu0 %v1154
    %v1193 = vpop.f32.mrb[0].mxu0
    %v1194 = vadd.f32 %v1126, %v1193
    %v1195 = vpop.f32.mrb[0].mxu0
    %v1196 = vadd.f32 %v1126, %v1195
    %v1197 = vpop.f32.mrb[0].mxu0
    %v1198 = vadd.f32 %v1131, %v1197
    %v1199 = vpop.f32.mrb[0].mxu0
    %v1200 = vadd.f32 %v1131, %v1199
    %1201 = vmatprep.mubr.bf16.mxu0 0
    %1202 = vmatmul.mubr.bf16.gmra.mrb[0].mxu0 %v1157
    %v1203 = vpop.f32.mrb[0].mxu0
    %v1204 = vadd.f32 %v1136, %v1203
    %v1205 = vpop.f32.mrb[0].mxu0
    %v1206 = vadd.f32 %v1136, %v1205
    %v1207 = vpop.f32.mrb[0].mxu0
    %v1208 = vadd.f32 %v1141, %v1207
    %v1209 = vpop.f32.mrb[0].mxu0
    %v1210 = vadd.f32 %v1141, %v1209
    %1211 = vdwg.mxu0
    %1212 = vmatprep.subr.bf16.mxu0 0
    %1213 = vmatpush1.bf16.msra.mxu0 %v1113
    %1214 = vmatprep.subr.bf16.mxu0 0
    %1215 = vmatpush1.bf16.msra.mxu0 %v1116
    %1216 = vmatprep.subr.bf16.mxu0 0
    %1217 = vmatpush1.bf16.msra.mxu0 %v1119
    %1218 = vmatprep.subr.bf16.mxu0 0
    %1219 = vmatpush1.bf16.msra.mxu0 %v1122
    %1220 = vmatprep.subr.bf16.mxu0 0
    %1221 = vmatpush1.bf16.msra.mxu0 0
    %1222 = vmatprep.subr.bf16.mxu0 0
    %1223 = vmatpush1.bf16.msra.mxu0 0
    %1224 = vmatprep.subr.bf16.mxu0 0
    %1225 = vmatpush1.bf16.msra.mxu0 0
    %1226 = vmatprep.subr.bf16.mxu0 0
    %1227 = vmatpush1.bf16.msra.mxu0 0
    %1228 = vmatprep.subr.bf16.mxu0 0
    %1229 = vmatpush1.bf16.msra.mxu0 0
    %1230 = vmatprep.subr.bf16.mxu0 0
    %1231 = vmatpush1.bf16.msra.mxu0 0
    %1232 = vmatprep.subr.bf16.mxu0 0
    %1233 = vmatpush1.bf16.msra.mxu0 0
    %1234 = vmatprep.subr.bf16.mxu0 0
    %1235 = vmatpush1.bf16.msra.mxu0 0
    %1236 = vmatprep.subr.bf16.mxu0 0
    %1237 = vmatpush1.bf16.msra.mxu0 0
    %1238 = vmatprep.subr.bf16.mxu0 0
    %1239 = vmatpush1.bf16.msra.mxu0 0
    %1240 = vmatprep.subr.bf16.mxu0 0
    %1241 = vmatpush1.bf16.msra.mxu0 0
    %1242 = vmatprep.subr.bf16.mxu0 0
    %1243 = vmatpush1.bf16.msra.mxu0 0
    %1244 = vmatprep.mubr.bf16.mxu0 0
    %1245 = vmatmul.mubr.bf16.gmra.mrb[0].mxu0 %v1154
    %v1246 = vpop.f32.mrb[0].mxu0
    %v1247 = vadd.f32 %v1126, %v1246
    %v1248 = vpop.f32.mrb[0].mxu0
    %v1249 = vpop.f32.mrb[0].mxu0
    %v1250 = vadd.f32 %v1131, %v1249
    %v1251 = vpop.f32.mrb[0].mxu0
    %1252 = vmatprep.mubr.bf16.mxu0 0
    %1253 = vmatmul.mubr.bf16.gmra.mrb[0].mxu0 %v1157
    %v1254 = vpop.f32.mrb[0].mxu0
    %v1255 = vadd.f32 %v1136, %v1254
    %v1256 = vpop.f32.mrb[0].mxu0
    %v1257 = vpop.f32.mrb[0].mxu0
    %v1258 = vadd.f32 %v1141, %v1257
    %v1259 = vpop.f32.mrb[0].mxu0
    %1260 = vdwg.mxu0
    %v1261 = vpack.c.bf16 %v1198, %v1194
    %v1262 = vpack.c.bf16 %v1200, %v1196
    %v1263 = vpack.c.bf16 %v1250, %v1247
    %v1264 = vpack.c.bf16 %v1208, %v1204
    %v1265 = vpack.c.bf16 %v1210, %v1206
    %v1266 = vpack.c.bf16 %v1258, %v1255
    %vm1267 = vcmp.ge.bf16.partialorder %v1261, 0
    %vm1268 = vcmp.ge.bf16.partialorder %v1262, 0
    %vm1269 = vcmp.ge.bf16.partialorder %v1263, 0
    %vm1270 = vcmp.ge.bf16.partialorder %v1264, 0
    %vm1271 = vcmp.ge.bf16.partialorder %v1265, 0
    %vm1272 = vcmp.ge.bf16.partialorder %v1266, 0
    %v1273 = vmul.bf16 %v1261, 1047215723
    %v1274 = vmul.bf16 %v1262, 1047215723
    %v1275 = vmul.bf16 %v1263, 1047215723
    %v1276 = vmul.bf16 %v1264, 1047215723
    %v1277 = vmul.bf16 %v1265, 1047215723
    %v1278 = vmul.bf16 %v1266, 1047215723
    %v1279 = vsel %vm1267, %v1261, %v1273
    %v1280 = vsel %vm1268, %v1262, %v1274
    %v1281 = vsel %vm1269, %v1263, %v1275
    %v1282 = vsel %vm1270, %v1264, %v1276
    %v1283 = vsel %vm1271, %v1265, %v1277
    %v1284 = vsel %vm1272, %v1266, %v1278
    %1286 = vset.pattern.permute.xlu0 0
    %1287 = vperm.xlu0 %1286, %v121
    %v1288 = vpop.permute.xlu0 %1287
    %vm1290 = vcmask 261120
    %v1292 = vsel %vm1290, %v83, 0
    %1294 = vmatprep.subr.bf16.mxu0 %v1280
    %1295 = vmatpush1.bf16.msra.mxu0 %v1279
    %1296 = vmatprep.subr.bf16.mxu0 %v1283
    %1297 = vmatpush1.bf16.msra.mxu0 %v1282
    %1298 = vmatprep.subr.bf16.mxu0 0
    %1299 = vmatpush1.bf16.msra.mxu0 0
    %1300 = vmatprep.subr.bf16.mxu0 0
    %1301 = vmatpush1.bf16.msra.mxu0 0
    %1302 = vmatprep.subr.bf16.mxu0 0
    %1303 = vmatpush1.bf16.msra.mxu0 0
    %1304 = vmatprep.subr.bf16.mxu0 0
    %1305 = vmatpush1.bf16.msra.mxu0 0
    %1306 = vmatprep.subr.bf16.mxu0 0
    %1307 = vmatpush1.bf16.msra.mxu0 0
    %1308 = vmatprep.subr.bf16.mxu0 0
    %1309 = vmatpush1.bf16.msra.mxu0 0
    %1310 = vmatprep.subr.bf16.mxu0 0
    %1311 = vmatpush1.bf16.msra.mxu0 0
    %1312 = vmatprep.subr.bf16.mxu0 0
    %1313 = vmatpush1.bf16.msra.mxu0 0
    %1314 = vmatprep.subr.bf16.mxu0 0
    %1315 = vmatpush1.bf16.msra.mxu0 0
    %1316 = vmatprep.subr.bf16.mxu0 0
    %1317 = vmatpush1.bf16.msra.mxu0 0
    %1318 = vmatprep.subr.bf16.mxu0 0
    %1319 = vmatpush1.bf16.msra.mxu0 0
    %1320 = vmatprep.subr.bf16.mxu0 0
    %1321 = vmatpush1.bf16.msra.mxu0 0
    %1322 = vmatprep.subr.bf16.mxu0 0
    %1323 = vmatpush1.bf16.msra.mxu0 0
    %1324 = vmatprep.subr.bf16.mxu0 0
    %1325 = vmatpush1.bf16.msra.mxu0 0
    %1326 = vmatprep.mubr.bf16.mxu0 0
    %1327 = vmatmul.mubr.bf16.gmra.mrb[0].mxu0 %v1292
    %v1328 = vpop.f32.mrb[0].mxu0
    %v1329 = vadd.f32 %v1288, %v1328
    %v1330 = vpop.f32.mrb[0].mxu0
    %v1331 = vadd.f32 %v1288, %v1330
    %v1332 = vpop.f32.mrb[0].mxu0
    %v1333 = vpop.f32.mrb[0].mxu0
    %1334 = vdwg.mxu0
    %1335 = vmatprep.subr.bf16.mxu0 0
    %1336 = vmatpush1.bf16.msra.mxu0 %v1281
    %1337 = vmatprep.subr.bf16.mxu0 0
    %1338 = vmatpush1.bf16.msra.mxu0 %v1284
    %1339 = vmatprep.subr.bf16.mxu0 0
    %1340 = vmatpush1.bf16.msra.mxu0 0
    %1341 = vmatprep.subr.bf16.mxu0 0
    %1342 = vmatpush1.bf16.msra.mxu0 0
    %1343 = vmatprep.subr.bf16.mxu0 0
    %1344 = vmatpush1.bf16.msra.mxu0 0
    %1345 = vmatprep.subr.bf16.mxu0 0
    %1346 = vmatpush1.bf16.msra.mxu0 0
    %1347 = vmatprep.subr.bf16.mxu0 0
    %1348 = vmatpush1.bf16.msra.mxu0 0
    %1349 = vmatprep.subr.bf16.mxu0 0
    %1350 = vmatpush1.bf16.msra.mxu0 0
    %1351 = vmatprep.subr.bf16.mxu0 0
    %1352 = vmatpush1.bf16.msra.mxu0 0
    %1353 = vmatprep.subr.bf16.mxu0 0
    %1354 = vmatpush1.bf16.msra.mxu0 0
    %1355 = vmatprep.subr.bf16.mxu0 0
    %1356 = vmatpush1.bf16.msra.mxu0 0
    %1357 = vmatprep.subr.bf16.mxu0 0
    %1358 = vmatpush1.bf16.msra.mxu0 0
    %1359 = vmatprep.subr.bf16.mxu0 0
    %1360 = vmatpush1.bf16.msra.mxu0 0
    %1361 = vmatprep.subr.bf16.mxu0 0
    %1362 = vmatpush1.bf16.msra.mxu0 0
    %1363 = vmatprep.subr.bf16.mxu0 0
    %1364 = vmatpush1.bf16.msra.mxu0 0
    %1365 = vmatprep.subr.bf16.mxu0 0
    %1366 = vmatpush1.bf16.msra.mxu0 0
    %1367 = vmatprep.mubr.bf16.mxu0 0
    %1368 = vmatmul.mubr.bf16.gmra.mrb[0].mxu0 %v1292
    %v1369 = vpop.f32.mrb[0].mxu0
    %v1370 = vadd.f32 %v1288, %v1369
    %v1371 = vpop.f32.mrb[0].mxu0
    %v1372 = vpop.f32.mrb[0].mxu0
    %v1373 = vpop.f32.mrb[0].mxu0
    %1374 = vdwg.mxu0
    %v1375 = vpack.c.bf16 %v1329, %v1329
    %v1376 = vpack.c.bf16 %v1331, %v1331
    %v1377 = vpack.c.bf16 %v1370, %v1370
    %vm1378 = vcmp.ge.bf16.partialorder %v1375, 0
    %vm1379 = vcmp.ge.bf16.partialorder %v1376, 0
    %vm1380 = vcmp.ge.bf16.partialorder %v1377, 0
    %v1381 = vmul.bf16 %v1375, 1047215723
    %v1382 = vmul.bf16 %v1376, 1047215723
    %v1383 = vmul.bf16 %v1377, 1047215723
    %v1384 = vsel %vm1378, %v1375, %v1381
    %v1385 = vsel %vm1379, %v1376, %v1382
    %v1386 = vsel %vm1380, %v1377, %v1383
    %1388 = vset.pattern.permute.xlu0 0
    %1389 = vperm.xlu0 %1388, %v122
    %v1390 = vpop.permute.xlu0 %1389
    %vm1392 = vcmask 64512
    %v1394 = vsel %vm1392, %v84, 0
    %vm1396 = vcmask 1043456
    %v1398 = vsel %vm1396, %v1384, 0
    %v1401 = vsel %vm1396, %v1385, 0
    %v1404 = vsel %vm1396, %v1386, 0
    %1406 = vmatprep.subr.bf16.mxu0 %v1401
    %1407 = vmatpush1.bf16.msra.mxu0 %v1398
    %1408 = vmatprep.subr.bf16.mxu0 0
    %1409 = vmatpush1.bf16.msra.mxu0 0
    %1410 = vmatprep.subr.bf16.mxu0 0
    %1411 = vmatpush1.bf16.msra.mxu0 0
    %1412 = vmatprep.subr.bf16.mxu0 0
    %1413 = vmatpush1.bf16.msra.mxu0 0
    %1414 = vmatprep.subr.bf16.mxu0 0
    %1415 = vmatpush1.bf16.msra.mxu0 0
    %1416 = vmatprep.subr.bf16.mxu0 0
    %1417 = vmatpush1.bf16.msra.mxu0 0
    %1418 = vmatprep.subr.bf16.mxu0 0
    %1419 = vmatpush1.bf16.msra.mxu0 0
    %1420 = vmatprep.subr.bf16.mxu0 0
    %1421 = vmatpush1.bf16.msra.mxu0 0
    %1422 = vmatprep.subr.bf16.mxu0 0
    %1423 = vmatpush1.bf16.msra.mxu0 0
    %1424 = vmatprep.subr.bf16.mxu0 0
    %1425 = vmatpush1.bf16.msra.mxu0 0
    %1426 = vmatprep.subr.bf16.mxu0 0
    %1427 = vmatpush1.bf16.msra.mxu0 0
    %1428 = vmatprep.subr.bf16.mxu0 0
    %1429 = vmatpush1.bf16.msra.mxu0 0
    %1430 = vmatprep.subr.bf16.mxu0 0
    %1431 = vmatpush1.bf16.msra.mxu0 0
    %1432 = vmatprep.subr.bf16.mxu0 0
    %1433 = vmatpush1.bf16.msra.mxu0 0
    %1434 = vmatprep.subr.bf16.mxu0 0
    %1435 = vmatpush1.bf16.msra.mxu0 0
    %1436 = vmatprep.subr.bf16.mxu0 0
    %1437 = vmatpush1.bf16.msra.mxu0 0
    %1438 = vmatprep.mubr.bf16.mxu0 0
    %1439 = vmatmul.mubr.bf16.gmra.mrb[0].mxu0 %v1394
    %v1440 = vpop.f32.mrb[0].mxu0
    %v1441 = vadd.f32 %v1390, %v1440
    %v1442 = vpop.f32.mrb[0].mxu0
    %v1443 = vadd.f32 %v1390, %v1442
    %v1444 = vpop.f32.mrb[0].mxu0
    %v1445 = vpop.f32.mrb[0].mxu0
    %1446 = vdwg.mxu0
    %1447 = vmatprep.subr.bf16.mxu0 0
    %1448 = vmatpush1.bf16.msra.mxu0 %v1404
    %1449 = vmatprep.subr.bf16.mxu0 0
    %1450 = vmatpush1.bf16.msra.mxu0 0
    %1451 = vmatprep.subr.bf16.mxu0 0
    %1452 = vmatpush1.bf16.msra.mxu0 0
    %1453 = vmatprep.subr.bf16.mxu0 0
    %1454 = vmatpush1.bf16.msra.mxu0 0
    %1455 = vmatprep.subr.bf16.mxu0 0
    %1456 = vmatpush1.bf16.msra.mxu0 0
    %1457 = vmatprep.subr.bf16.mxu0 0
    %1458 = vmatpush1.bf16.msra.mxu0 0
    %1459 = vmatprep.subr.bf16.mxu0 0
    %1460 = vmatpush1.bf16.msra.mxu0 0
    %1461 = vmatprep.subr.bf16.mxu0 0
    %1462 = vmatpush1.bf16.msra.mxu0 0
    %1463 = vmatprep.subr.bf16.mxu0 0
    %1464 = vmatpush1.bf16.msra.mxu0 0
    %1465 = vmatprep.subr.bf16.mxu0 0
    %1466 = vmatpush1.bf16.msra.mxu0 0
    %1467 = vmatprep.subr.bf16.mxu0 0
    %1468 = vmatpush1.bf16.msra.mxu0 0
    %1469 = vmatprep.subr.bf16.mxu0 0
    %1470 = vmatpush1.bf16.msra.mxu0 0
    %1471 = vmatprep.subr.bf16.mxu0 0
    %1472 = vmatpush1.bf16.msra.mxu0 0
    %1473 = vmatprep.subr.bf16.mxu0 0
    %1474 = vmatpush1.bf16.msra.mxu0 0
    %1475 = vmatprep.subr.bf16.mxu0 0
    %1476 = vmatpush1.bf16.msra.mxu0 0
    %1477 = vmatprep.subr.bf16.mxu0 0
    %1478 = vmatpush1.bf16.msra.mxu0 0
    %1479 = vmatprep.mubr.bf16.mxu0 0
    %1480 = vmatmul.mubr.bf16.gmra.mrb[0].mxu0 %v1394
    %v1481 = vpop.f32.mrb[0].mxu0
    %v1482 = vadd.f32 %v1390, %v1481
    %v1483 = vpop.f32.mrb[0].mxu0
    %v1484 = vpop.f32.mrb[0].mxu0
    %v1485 = vpop.f32.mrb[0].mxu0
    %1486 = vdwg.mxu0
    %vm1487 = vcmask 1042432
    %v1488 = vsel %vm1487, %v1441, -inf
    %v1489 = vrot.slane %v1488, 4
    %v1490 = vmax.f32 %v1488, %v1489
    %v1491 = vrot.slane %v1490, 2
    %v1492 = vmax.f32 %v1490, %v1491
    %v1493 = vrot.slane %v1492, 1
    %v1494 = vmax.f32 %v1492, %v1493
    %v1495 = vsel %vm1487, %v1443, -inf
    %v1496 = vrot.slane %v1495, 4
    %v1497 = vmax.f32 %v1495, %v1496
    %v1498 = vrot.slane %v1497, 2
    %v1499 = vmax.f32 %v1497, %v1498
    %v1500 = vrot.slane %v1499, 1
    %v1501 = vmax.f32 %v1499, %v1500
    %v1502 = vsel %vm1487, %v1482, -inf
    %v1503 = vrot.slane %v1502, 4
    %v1504 = vmax.f32 %v1502, %v1503
    %v1505 = vrot.slane %v1504, 2
    %v1506 = vmax.f32 %v1504, %v1505
    %v1507 = vrot.slane %v1506, 1
    %v1508 = vmax.f32 %v1506, %v1507
    %v1509 = vsub.f32 %v1441, %v1494
    %v1510 = vsub.f32 %v1443, %v1501
    %v1511 = vsub.f32 %v1482, %v1508
    %v1512 = vmul.f32 %v1509, 1.442695
    %v1513 = vpow.pop %v1512
    %v1514 = vmul.f32 %v1510, 1.442695
    %v1515 = vpow.pop %v1514
    %v1516 = vmul.f32 %v1511, 1.442695
    %v1517 = vpow.pop %v1516
    %v1518 = vsel %vm1487, %v1513, 0.0
    %v1519 = vrot.slane %v1518, 4
    %v1520 = vadd.f32 %v1518, %v1519
    %v1521 = vrot.slane %v1520, 2
    %v1522 = vadd.f32 %v1520, %v1521
    %v1523 = vrot.slane %v1522, 1
    %v1524 = vadd.f32 %v1522, %v1523
    %v1525 = vsel %vm1487, %v1515, 0.0
    %v1526 = vrot.slane %v1525, 4
    %v1527 = vadd.f32 %v1525, %v1526
    %v1528 = vrot.slane %v1527, 2
    %v1529 = vadd.f32 %v1527, %v1528
    %v1530 = vrot.slane %v1529, 1
    %v1531 = vadd.f32 %v1529, %v1530
    %v1532 = vsel %vm1487, %v1517, 0.0
    %v1533 = vrot.slane %v1532, 4
    %v1534 = vadd.f32 %v1532, %v1533
    %v1535 = vrot.slane %v1534, 2
    %v1536 = vadd.f32 %v1534, %v1535
    %v1537 = vrot.slane %v1536, 1
    %v1538 = vadd.f32 %v1536, %v1537
    %v1539 = vrcp.pop %v1524
    %v1540 = vrcp.pop %v1531
    %v1541 = vrcp.pop %v1538
    %v1542 = vmul.f32 %v1513, %v1539
    %v1543 = vmul.f32 %v1515, %v1540
    %v1544 = vmul.f32 %v1517, %v1541
    %v1547 = vcombine.low %v1542, %v1543
    %1549 = vst [vmem:[#allocation2] sm:$0x77] %v1547
    %1550 = vst [vmem:[#allocation2 + $0x8] sm:$0x7] %v1544
    // Predicated region
    $region54: #{tpu_custom_call.1} parent=1 // pred_check
      _
    $region55: #{tpu_custom_call.1} parent=1 // pred_check_branch
      %1552 = sbr.rel (0) target = $region57
    $region56: #{tpu_custom_call.1} parent=1 // pred_region
      %s1554 = ssub.s32 192, 192
      %1555 = vsyncadd [#allocation3], %s1554
      %s1557 = sshll.u32 [#allocation2], 4
      %s1558 = int_to_ptr.vmem [resolvable:$true] %s1557
      %1560 = dma.vmem_to_hbm [thread:$0]  %s1558, 192, %s13, [#allocation3]
    $region57: #{tpu_custom_call.1} parent=1 // pred_fallthru
      _
    // Predicated region
    $region58: #{tpu_custom_call.1} parent=1 // pred_check
      _
    $region59: #{tpu_custom_call.1} parent=1 // pred_check_branch
      %1562 = sbr.rel (0) target = $region61
    $region60: #{tpu_custom_call.1} parent=1 // pred_region
      %1563 = dma.done [#allocation3], 192
    $region61: #{tpu_custom_call.1} parent=1 // pred_fallthru
      _
    %1564 = vsyncpa [#allocation3], 1

</llo_original>
